<compile_context>
chip_gen: v7x
topology: tpu7x:2x2x1
jax: 0.10.0
libtpu: 0.0.40
codegen_flags: <defaults>
</compile_context>

<pallas_src>
import functools

import numpy as np
import jax
import jax.numpy as jnp
from jax import lax
from jax.experimental import pallas as pl
from jax.experimental.pallas import tpu as pltpu

NEG_SLOPE = 0.01   # torch.nn.LeakyReLU default
BN_EPS = 1e-5      # torch.nn.BatchNorm2d default


def _round_up(v, m):
    return (v + m - 1) // m * m


def _leaky(v):
    return jnp.where(v >= 0, v, NEG_SLOPE * v)


def _ic_block_kernel(x_ref, mask_ref,
                     bn1g_ref, bn1b_ref, w1_ref, b1_ref,
                     bn2g_ref, bn2b_ref, w2s_ref, b2s_ref,
                     out_ref,
                     pad_buf, stack_buf,
                     *, wp, margin, inv_count, c_p, ci_p, n_blocks):
    L = out_ref.shape[1]                       # lane-padded length (mult. 128)

    # Zero only the left/right margins of the shift-staging buffer once; the
    # interior [margin, margin+L) is fully overwritten before every conv.
    pad_buf[:, :margin] = jnp.zeros((pad_buf.shape[0], margin), pad_buf.dtype)
    pad_buf[:, margin + L:] = jnp.zeros(
        (pad_buf.shape[0], pad_buf.shape[1] - margin - L), pad_buf.dtype)

    # Hoist the mask broadcasts out of the block loop (no CSE of broadcasts).
    mask = mask_ref[...]                                   # (1, L)
    mask_c = jnp.broadcast_to(mask, (c_p, L))
    mask_ci = jnp.broadcast_to(mask, (ci_p, L))

    def bn_leaky(v, gamma, beta, maskf):
        # Training-mode BatchNorm2d: single-pass biased batch stats over the
        # N*H*W valid pixels, then affine + LeakyReLU, re-zero invalid lanes.
        vm = v * maskf
        s1 = jnp.sum(vm, axis=1, keepdims=True)
        s2 = jnp.sum(vm * v, axis=1, keepdims=True)
        mean = s1 * inv_count
        var = s2 * inv_count - mean * mean
        y = (v - mean) * (gamma * lax.rsqrt(var + BN_EPS)) + beta
        return _leaky(y) * maskf

    def conv_stacked(act, rows_in, w_flat, bias, extra=None):
        # Stage the (already zero-masked) activation into the margin buffer,
        # build the 9-tap shifted stack (plus optional fused 1x1-skip rows),
        # then a SINGLE wide-K MXU matmul (cross-correlation, padding=1).
        cin = act.shape[0]
        pad_buf[:cin, margin:margin + L] = act
        for t in range(9):
            ky, kx = divmod(t, 3)
            d = (ky - 1) * wp + (kx - 1)
            stack_buf[t * cin:(t + 1) * cin, :] = \
                pad_buf[:cin, margin + d:margin + d + L]
        if extra is not None:
            stack_buf[9 * cin:9 * cin + extra.shape[0], :] = extra
        return jnp.dot(w_flat, stack_buf[:rows_in, :],
                       preferred_element_type=jnp.float32) + bias

    def block_body(blk, cur):                  # one _RCBlock
        a1 = bn_leaky(cur, bn1g_ref[blk], bn1b_ref[blk], mask_c)
        z1 = conv_stacked(a1, 9 * c_p, w1_ref[blk], b1_ref[blk])
        a2 = bn_leaky(z1, bn2g_ref[blk], bn2b_ref[blk], mask_ci)
        # Second 3x3 conv with the 1x1 skip fused in as a 10th row-group.
        return conv_stacked(a2, 9 * ci_p + c_p, w2s_ref[blk], b2s_ref[blk],
                            extra=cur)

    out_ref[...] = lax.fori_loop(0, n_blocks, block_body, x_ref[...])


def make_params(key, in_channels, n_blocks=4):
    """Deterministic synthetic parameters matching _RCBlock's shapes."""
    cinner = max(16, in_channels // 2)
    blocks = []
    for bk in jax.random.split(key, n_blocks):
        ks = jax.random.split(bk, 10)
        blocks.append(dict(
            bn1_gamma=1.0 + 0.1 * jax.random.normal(ks[0], (in_channels,), jnp.float32),
            bn1_beta=0.1 * jax.random.normal(ks[1], (in_channels,), jnp.float32),
            w1=0.2 * jax.random.normal(ks[2], (cinner, in_channels, 3, 3), jnp.float32),
            b1=0.1 * jax.random.normal(ks[3], (cinner,), jnp.float32),
            bn2_gamma=1.0 + 0.1 * jax.random.normal(ks[4], (cinner,), jnp.float32),
            bn2_beta=0.1 * jax.random.normal(ks[5], (cinner,), jnp.float32),
            w2=0.2 * jax.random.normal(ks[6], (in_channels, cinner, 3, 3), jnp.float32),
            b2=0.1 * jax.random.normal(ks[7], (in_channels,), jnp.float32),
            ws=0.2 * jax.random.normal(ks[8], (in_channels, in_channels), jnp.float32),
            bs=0.1 * jax.random.normal(ks[9], (in_channels,), jnp.float32),
        ))
    return blocks, cinner


def ic_block_forward(x_nchw, blocks, cinner):
    """Pallas implementation of _ICBlock.forward.  x_nchw: (N, C, H, W)."""
    n, c, h, w = x_nchw.shape
    hp, wp = h + 2, w + 2
    L = n * hp * wp
    L_pad = _round_up(L, 128)                 # lane-dense output / buffers
    c_p = _round_up(c, 8)                     # sublane-dense channels
    ci_p = _round_up(cinner, 8)
    margin = _round_up(wp + 1, 128)           # aligned staging margin
    nb = len(blocks)
    max_cp = max(c_p, ci_p)
    stack_rows = max(9 * c_p, 9 * ci_p + c_p)

    # NCHW -> zero-padded, lane/sublane-aligned (c_p, L_pad) layout.
    xp = jnp.pad(x_nchw.astype(jnp.float32), ((0, 0), (0, 0), (1, 1), (1, 1)))
    x2 = jnp.transpose(xp, (1, 0, 2, 3)).reshape(c, L)
    x2 = jnp.pad(x2, ((0, c_p - c), (0, L_pad - L)))

    mask_np = np.zeros((n, hp, wp), np.float32)
    mask_np[:, 1:h + 1, 1:w + 1] = 1.0
    mask = np.zeros((1, L_pad), np.float32)
    mask[0, :L] = mask_np.reshape(L)
    mask = jnp.asarray(mask)

    # Per-block parameters, channel-padded.  Conv weights are flattened
    # tap-major to (C_out_p, 9*C_in_p) to match the stacked activation; the
    # 1x1 skip weight / bias are fused into the second conv.
    def pad1(v, tot):
        return jnp.pad(v, (0, tot - v.shape[0]))

    def flatten_conv(wconv, cout, cin, cout_p, cin_p):
        wpd = jnp.pad(wconv, ((0, cout_p - cout), (0, cin_p - cin),
                              (0, 0), (0, 0)))
        return jnp.transpose(wpd, (0, 2, 3, 1)).reshape(cout_p, 9 * cin_p)

    bn1g = jnp.stack([pad1(b['bn1_gamma'], c_p) for b in blocks])[:, :, None]
    bn1b = jnp.stack([pad1(b['bn1_beta'], c_p) for b in blocks])[:, :, None]
    bn2g = jnp.stack([pad1(b['bn2_gamma'], ci_p) for b in blocks])[:, :, None]
    bn2b = jnp.stack([pad1(b['bn2_beta'], ci_p) for b in blocks])[:, :, None]
    b1v = jnp.stack([pad1(b['b1'], ci_p) for b in blocks])[:, :, None]
    b2sv = jnp.stack([pad1(b['b2'] + b['bs'], c_p) for b in blocks])[:, :, None]
    w1f = jnp.stack([flatten_conv(b['w1'], cinner, c, ci_p, c_p)
                     for b in blocks])                   # (nb, ci_p, 9*c_p)
    w2s = jnp.stack([
        jnp.concatenate(
            [flatten_conv(b['w2'], c, cinner, c_p, ci_p),
             jnp.pad(b['ws'], ((0, c_p - c), (0, c_p - c)))], axis=1)
        for b in blocks])                                # (nb, c_p, 9*ci_p+c_p)

    kernel = functools.partial(
        _ic_block_kernel, wp=wp, margin=margin,
        inv_count=1.0 / float(n * h * w), c_p=c_p, ci_p=ci_p, n_blocks=nb)
    vmem_spec = pl.BlockSpec(memory_space=pltpu.MemorySpace.VMEM)

    # Explicit VMEM budget (default scoped limit is well below physical).
    major_bytes = 4 * (2 * c_p * L_pad                      # x2 + out
                       + max_cp * (L_pad + 2 * margin)      # pad_buf
                       + stack_rows * L_pad                 # stack_buf
                       + 3 * (c_p + ci_p) * L_pad)          # live intermediates
    vmem_limit = int(min(max(2 * major_bytes, 32 * 2**20), 56 * 2**20))

    out2 = pl.pallas_call(
        kernel,
        out_shape=jax.ShapeDtypeStruct((c_p, L_pad), jnp.float32),
        in_specs=[vmem_spec] * 10,
        out_specs=vmem_spec,
        scratch_shapes=[
            pltpu.VMEM((max_cp, L_pad + 2 * margin), jnp.float32),  # staging
            pltpu.VMEM((stack_rows, L_pad), jnp.float32),           # tap stack
        ],
        compiler_params=pltpu.CompilerParams(vmem_limit_bytes=vmem_limit),
    )(x2, mask, bn1g, bn1b, w1f, b1v, bn2g, bn2b, w2s, b2sv)

    out = out2[:c, :L].reshape(c, n, hp, wp)[:, :, 1:h + 1, 1:w + 1]
    return jnp.transpose(out, (1, 0, 2, 3))


# ----------------------- pure-JAX reference (NCHW) ------------------------- #
def _ref_bn_leaky(x, gamma, beta):
    mean = jnp.mean(x, axis=(0, 2, 3), keepdims=True)
    var = jnp.mean((x - mean) ** 2, axis=(0, 2, 3), keepdims=True)
    y = gamma[None, :, None, None] * (x - mean) * lax.rsqrt(var + BN_EPS) \
        + beta[None, :, None, None]
    return jnp.where(y >= 0, y, NEG_SLOPE * y)


def ref_forward(x, blocks):
    dn = ('NCHW', 'OIHW', 'NCHW')
    for p in blocks:
        a1 = _ref_bn_leaky(x, p['bn1_gamma'], p['bn1_beta'])
        z1 = lax.conv_general_dilated(a1, p['w1'], (1, 1), 'SAME',
                                      dimension_numbers=dn) \
            + p['b1'][None, :, None, None]
        a2 = _ref_bn_leaky(z1, p['bn2_gamma'], p['bn2_beta'])
        z2 = lax.conv_general_dilated(a2, p['w2'], (1, 1), 'SAME',
                                      dimension_numbers=dn) \
            + p['b2'][None, :, None, None]
        skip = jnp.einsum('oc,nchw->nohw', p['ws'], x) \
            + p['bs'][None, :, None, None]
        x = skip + z2
    return x


if __name__ == "__main__":
    N, C, H, W = 2, 4, 16, 16           # in_channels=4 -> inner_channels=16
    key = jax.random.PRNGKey(0)
    kx, kp = jax.random.split(key)
    x = jax.random.normal(kx, (N, C, H, W), jnp.float32)

    blocks, cinner = make_params(kp, C, n_blocks=4)

    out = ic_block_forward(x, blocks, cinner)
    out = jax.block_until_ready(out)
    assert out.shape == (N, C, H, W)

    ref = ref_forward(x, blocks)
    np.testing.assert_allclose(np.asarray(out), np.asarray(ref),
                               rtol=2e-3, atol=2e-3)
    print("KERNEL_OK")
</pallas_src>

<mosaic_0001>
module attributes {stable_mosaic.version = 11 : i64} {
  func.func @_ic_block_kernel(%arg0: memref<8x768xf32, #tpu.memory_space<vmem>>, %arg1: memref<1x768xf32, #tpu.memory_space<vmem>>, %arg2: memref<4x8x1xf32, #tpu.memory_space<vmem>>, %arg3: memref<4x8x1xf32, #tpu.memory_space<vmem>>, %arg4: memref<4x16x72xf32, #tpu.memory_space<vmem>>, %arg5: memref<4x16x1xf32, #tpu.memory_space<vmem>>, %arg6: memref<4x16x1xf32, #tpu.memory_space<vmem>>, %arg7: memref<4x16x1xf32, #tpu.memory_space<vmem>>, %arg8: memref<4x8x152xf32, #tpu.memory_space<vmem>>, %arg9: memref<4x8x1xf32, #tpu.memory_space<vmem>>, %arg10: memref<8x768xf32, #tpu.memory_space<vmem>>, %arg11: memref<16x1024xf32, #tpu.memory_space<vmem>>, %arg12: memref<152x768xf32, #tpu.memory_space<vmem>>) attributes {dimension_semantics = [], scalar_prefetch = 0 : i64, scratch_operands = 2 : i64, tpu.core_type = #tpu.core_type<tc>} {
    %cst = arith.constant 0.000000e+00 : f32
    %0 = vector.broadcast %cst : f32 to vector<16x128xf32>
    %c0 = arith.constant 0 : index
    %c0_0 = arith.constant 0 : index
    %1 = vector.load %arg11[%c0, %c0_0] : memref<16x1024xf32, #tpu.memory_space<vmem>>, vector<16x128xf32>
    tpu.vector_store %arg11[%c0, %c0_0], %0 {strides = array<i32>} : memref<16x1024xf32, #tpu.memory_space<vmem>>, vector<16x128xf32>,
    %cst_1 = arith.constant 0.000000e+00 : f32
    %2 = vector.broadcast %cst_1 : f32 to vector<16x128xf32>
    %c0_2 = arith.constant 0 : index
    %c896 = arith.constant 896 : index
    %3 = vector.load %arg11[%c0_2, %c896] : memref<16x1024xf32, #tpu.memory_space<vmem>>, vector<16x128xf32>
    tpu.vector_store %arg11[%c0_2, %c896], %2 {strides = array<i32>} : memref<16x1024xf32, #tpu.memory_space<vmem>>, vector<16x128xf32>,
    %c0_3 = arith.constant 0 : index
    %c0_4 = arith.constant 0 : index
    %4 = vector.load %arg1[%c0_3, %c0_4] : memref<1x768xf32, #tpu.memory_space<vmem>>, vector<1x768xf32>
    %5 = vector.shape_cast %4 : vector<1x768xf32> to vector<1x768xf32>
    %6 = vector.broadcast %5 : vector<1x768xf32> to vector<8x768xf32>
    %7 = vector.shape_cast %4 : vector<1x768xf32> to vector<1x768xf32>
    %8 = vector.broadcast %7 : vector<1x768xf32> to vector<16x768xf32>
    %c0_5 = arith.constant 0 : index
    %c0_6 = arith.constant 0 : index
    %9 = vector.load %arg0[%c0_5, %c0_6] : memref<8x768xf32, #tpu.memory_space<vmem>>, vector<8x768xf32>
    %c0_i32 = arith.constant 0 : i32
    %c4_i32 = arith.constant 4 : i32
    %10 = arith.addi %c0_i32, %c4_i32 : i32
    %c1_i32 = arith.constant 1 : i32
    %11 = scf.for %arg13 = %c0_i32 to %10 step %c1_i32 iter_args(%arg14 = %9) -> (vector<8x768xf32>)  : i32 {
      %13 = arith.index_cast %arg13 : i32 to index
      %c0_10 = arith.constant 0 : index
      %c0_11 = arith.constant 0 : index
      %14 = vector.load %arg2[%13, %c0_10, %c0_11] : memref<4x8x1xf32, #tpu.memory_space<vmem>>, vector<1x8x1xf32>
      %15 = vector.shape_cast %14 : vector<1x8x1xf32> to vector<8x1xf32>
      %16 = arith.index_cast %arg13 : i32 to index
      %c0_12 = arith.constant 0 : index
      %c0_13 = arith.constant 0 : index
      %17 = vector.load %arg3[%16, %c0_12, %c0_13] : memref<4x8x1xf32, #tpu.memory_space<vmem>>, vector<1x8x1xf32>
      %18 = vector.shape_cast %17 : vector<1x8x1xf32> to vector<8x1xf32>
      %19 = arith.mulf %arg14, %6 : vector<8x768xf32>
      %cst_14 = arith.constant dense<0.000000e+00> : vector<8xf32>
      %20 = vector.multi_reduction <add>, %19, %cst_14 [1] : vector<8x768xf32> to vector<8xf32>
      %21 = vector.shape_cast %20 : vector<8xf32> to vector<8x1xf32>
      %22 = arith.mulf %19, %arg14 : vector<8x768xf32>
      %cst_15 = arith.constant dense<0.000000e+00> : vector<8xf32>
      %23 = vector.multi_reduction <add>, %22, %cst_15 [1] : vector<8x768xf32> to vector<8xf32>
      %24 = vector.shape_cast %23 : vector<8xf32> to vector<8x1xf32>
      %cst_16 = arith.constant 0.001953125 : f32
      %25 = vector.broadcast %cst_16 : f32 to vector<8x1xf32>
      %26 = arith.mulf %21, %25 : vector<8x1xf32>
      %cst_17 = arith.constant 0.001953125 : f32
      %27 = vector.broadcast %cst_17 : f32 to vector<8x1xf32>
      %28 = arith.mulf %24, %27 : vector<8x1xf32>
      %29 = arith.mulf %26, %26 : vector<8x1xf32>
      %30 = arith.subf %28, %29 : vector<8x1xf32>
      %31 = vector.broadcast %26 : vector<8x1xf32> to vector<8x768xf32>
      %32 = arith.subf %arg14, %31 : vector<8x768xf32>
      %cst_18 = arith.constant 9.99999974E-6 : f32
      %33 = vector.broadcast %cst_18 : f32 to vector<8x1xf32>
      %34 = arith.addf %30, %33 : vector<8x1xf32>
      %35 = math.rsqrt %34 : vector<8x1xf32>
      %36 = arith.mulf %15, %35 : vector<8x1xf32>
      %37 = vector.broadcast %36 : vector<8x1xf32> to vector<8x768xf32>
      %38 = arith.mulf %32, %37 : vector<8x768xf32>
      %39 = vector.broadcast %18 : vector<8x1xf32> to vector<8x768xf32>
      %40 = arith.addf %38, %39 : vector<8x768xf32>
      %cst_19 = arith.constant 0.000000e+00 : f32
      %41 = vector.broadcast %cst_19 : f32 to vector<8x768xf32>
      %42 = arith.cmpf oge, %40, %41 : vector<8x768xf32>
      %cst_20 = arith.constant 0.00999999977 : f32
      %43 = vector.broadcast %cst_20 : f32 to vector<8x768xf32>
      %44 = arith.mulf %43, %40 : vector<8x768xf32>
      %45 = arith.select %42, %40, %44 : vector<8x768xi1>, vector<8x768xf32>
      %46 = arith.mulf %45, %6 : vector<8x768xf32>
      %47 = arith.index_cast %arg13 : i32 to index
      %c0_21 = arith.constant 0 : index
      %c0_22 = arith.constant 0 : index
      %48 = vector.load %arg4[%47, %c0_21, %c0_22] : memref<4x16x72xf32, #tpu.memory_space<vmem>>, vector<1x16x72xf32>
      %49 = vector.shape_cast %48 : vector<1x16x72xf32> to vector<16x72xf32>
      %50 = arith.index_cast %arg13 : i32 to index
      %c0_23 = arith.constant 0 : index
      %c0_24 = arith.constant 0 : index
      %51 = vector.load %arg5[%50, %c0_23, %c0_24] : memref<4x16x1xf32, #tpu.memory_space<vmem>>, vector<1x16x1xf32>
      %52 = vector.shape_cast %51 : vector<1x16x1xf32> to vector<16x1xf32>
      %c0_25 = arith.constant 0 : index
      %c128 = arith.constant 128 : index
      %53 = vector.load %arg11[%c0_25, %c128] : memref<16x1024xf32, #tpu.memory_space<vmem>>, vector<8x768xf32>
      tpu.vector_store %arg11[%c0_25, %c128], %46 {strides = array<i32>} : memref<16x1024xf32, #tpu.memory_space<vmem>>, vector<8x768xf32>,
      %c0_26 = arith.constant 0 : index
      %c109 = arith.constant 109 : index
      %54 = vector.load %arg11[%c0_26, %c109] : memref<16x1024xf32, #tpu.memory_space<vmem>>, vector<8x768xf32>
      %c0_27 = arith.constant 0 : index
      %c0_28 = arith.constant 0 : index
      %55 = vector.load %arg12[%c0_27, %c0_28] : memref<152x768xf32, #tpu.memory_space<vmem>>, vector<8x768xf32>
      tpu.vector_store %arg12[%c0_27, %c0_28], %54 {strides = array<i32>} : memref<152x768xf32, #tpu.memory_space<vmem>>, vector<8x768xf32>,
      %c0_29 = arith.constant 0 : index
      %c110 = arith.constant 110 : index
      %56 = vector.load %arg11[%c0_29, %c110] : memref<16x1024xf32, #tpu.memory_space<vmem>>, vector<8x768xf32>
      %c8 = arith.constant 8 : index
      %c0_30 = arith.constant 0 : index
      %57 = vector.load %arg12[%c8, %c0_30] : memref<152x768xf32, #tpu.memory_space<vmem>>, vector<8x768xf32>
      tpu.vector_store %arg12[%c8, %c0_30], %56 {strides = array<i32>} : memref<152x768xf32, #tpu.memory_space<vmem>>, vector<8x768xf32>,
      %c0_31 = arith.constant 0 : index
      %c111 = arith.constant 111 : index
      %58 = vector.load %arg11[%c0_31, %c111] : memref<16x1024xf32, #tpu.memory_space<vmem>>, vector<8x768xf32>
      %c16 = arith.constant 16 : index
      %c0_32 = arith.constant 0 : index
      %59 = vector.load %arg12[%c16, %c0_32] : memref<152x768xf32, #tpu.memory_space<vmem>>, vector<8x768xf32>
      tpu.vector_store %arg12[%c16, %c0_32], %58 {strides = array<i32>} : memref<152x768xf32, #tpu.memory_space<vmem>>, vector<8x768xf32>,
      %c0_33 = arith.constant 0 : index
      %c127 = arith.constant 127 : index
      %60 = vector.load %arg11[%c0_33, %c127] : memref<16x1024xf32, #tpu.memory_space<vmem>>, vector<8x768xf32>
      %c24 = arith.constant 24 : index
      %c0_34 = arith.constant 0 : index
      %61 = vector.load %arg12[%c24, %c0_34] : memref<152x768xf32, #tpu.memory_space<vmem>>, vector<8x768xf32>
      tpu.vector_store %arg12[%c24, %c0_34], %60 {strides = array<i32>} : memref<152x768xf32, #tpu.memory_space<vmem>>, vector<8x768xf32>,
      %c0_35 = arith.constant 0 : index
      %c128_36 = arith.constant 128 : index
      %62 = vector.load %arg11[%c0_35, %c128_36] : memref<16x1024xf32, #tpu.memory_space<vmem>>, vector<8x768xf32>
      %c32 = arith.constant 32 : index
      %c0_37 = arith.constant 0 : index
      %63 = vector.load %arg12[%c32, %c0_37] : memref<152x768xf32, #tpu.memory_space<vmem>>, vector<8x768xf32>
      tpu.vector_store %arg12[%c32, %c0_37], %62 {strides = array<i32>} : memref<152x768xf32, #tpu.memory_space<vmem>>, vector<8x768xf32>,
      %c0_38 = arith.constant 0 : index
      %c129 = arith.constant 129 : index
      %64 = vector.load %arg11[%c0_38, %c129] : memref<16x1024xf32, #tpu.memory_space<vmem>>, vector<8x768xf32>
      %c40 = arith.constant 40 : index
      %c0_39 = arith.constant 0 : index
      %65 = vector.load %arg12[%c40, %c0_39] : memref<152x768xf32, #tpu.memory_space<vmem>>, vector<8x768xf32>
      tpu.vector_store %arg12[%c40, %c0_39], %64 {strides = array<i32>} : memref<152x768xf32, #tpu.memory_space<vmem>>, vector<8x768xf32>,
      %c0_40 = arith.constant 0 : index
      %c145 = arith.constant 145 : index
      %66 = vector.load %arg11[%c0_40, %c145] : memref<16x1024xf32, #tpu.memory_space<vmem>>, vector<8x768xf32>
      %c48 = arith.constant 48 : index
      %c0_41 = arith.constant 0 : index
      %67 = vector.load %arg12[%c48, %c0_41] : memref<152x768xf32, #tpu.memory_space<vmem>>, vector<8x768xf32>
      tpu.vector_store %arg12[%c48, %c0_41], %66 {strides = array<i32>} : memref<152x768xf32, #tpu.memory_space<vmem>>, vector<8x768xf32>,
      %c0_42 = arith.constant 0 : index
      %c146 = arith.constant 146 : index
      %68 = vector.load %arg11[%c0_42, %c146] : memref<16x1024xf32, #tpu.memory_space<vmem>>, vector<8x768xf32>
      %c56 = arith.constant 56 : index
      %c0_43 = arith.constant 0 : index
      %69 = vector.load %arg12[%c56, %c0_43] : memref<152x768xf32, #tpu.memory_space<vmem>>, vector<8x768xf32>
      tpu.vector_store %arg12[%c56, %c0_43], %68 {strides = array<i32>} : memref<152x768xf32, #tpu.memory_space<vmem>>, vector<8x768xf32>,
      %c0_44 = arith.constant 0 : index
      %c147 = arith.constant 147 : index
      %70 = vector.load %arg11[%c0_44, %c147] : memref<16x1024xf32, #tpu.memory_space<vmem>>, vector<8x768xf32>
      %c64 = arith.constant 64 : index
      %c0_45 = arith.constant 0 : index
      %71 = vector.load %arg12[%c64, %c0_45] : memref<152x768xf32, #tpu.memory_space<vmem>>, vector<8x768xf32>
      tpu.vector_store %arg12[%c64, %c0_45], %70 {strides = array<i32>} : memref<152x768xf32, #tpu.memory_space<vmem>>, vector<8x768xf32>,
      %c0_46 = arith.constant 0 : index
      %c0_47 = arith.constant 0 : index
      %72 = vector.load %arg12[%c0_46, %c0_47] : memref<152x768xf32, #tpu.memory_space<vmem>>, vector<72x768xf32>
      %cst_48 = arith.constant dense<0.000000e+00> : vector<16x768xf32>
      %73 = tpu.matmul %49, %72, %cst_48 {dimension_numbers = #tpu.dot_dimension_numbers<[1], [0], [0], [1], [0, 0, 1, 1], [], []>} : vector<16x72xf32>, vector<72x768xf32>, vector<16x768xf32> -> vector<16x768xf32>
      %74 = vector.broadcast %52 : vector<16x1xf32> to vector<16x768xf32>
      %75 = arith.addf %73, %74 : vector<16x768xf32>
      %76 = arith.index_cast %arg13 : i32 to index
      %c0_49 = arith.constant 0 : index
      %c0_50 = arith.constant 0 : index
      %77 = vector.load %arg6[%76, %c0_49, %c0_50] : memref<4x16x1xf32, #tpu.memory_space<vmem>>, vector<1x16x1xf32>
      %78 = vector.shape_cast %77 : vector<1x16x1xf32> to vector<16x1xf32>
      %79 = arith.index_cast %arg13 : i32 to index
      %c0_51 = arith.constant 0 : index
      %c0_52 = arith.constant 0 : index
      %80 = vector.load %arg7[%79, %c0_51, %c0_52] : memref<4x16x1xf32, #tpu.memory_space<vmem>>, vector<1x16x1xf32>
      %81 = vector.shape_cast %80 : vector<1x16x1xf32> to vector<16x1xf32>
      %82 = arith.mulf %75, %8 : vector<16x768xf32>
      %cst_53 = arith.constant dense<0.000000e+00> : vector<16xf32>
      %83 = vector.multi_reduction <add>, %82, %cst_53 [1] : vector<16x768xf32> to vector<16xf32>
      %84 = vector.shape_cast %83 : vector<16xf32> to vector<16x1xf32>
      %85 = arith.mulf %82, %75 : vector<16x768xf32>
      %cst_54 = arith.constant dense<0.000000e+00> : vector<16xf32>
      %86 = vector.multi_reduction <add>, %85, %cst_54 [1] : vector<16x768xf32> to vector<16xf32>
      %87 = vector.shape_cast %86 : vector<16xf32> to vector<16x1xf32>
      %cst_55 = arith.constant 0.001953125 : f32
      %88 = vector.broadcast %cst_55 : f32 to vector<16x1xf32>
      %89 = arith.mulf %84, %88 : vector<16x1xf32>
      %cst_56 = arith.constant 0.001953125 : f32
      %90 = vector.broadcast %cst_56 : f32 to vector<16x1xf32>
      %91 = arith.mulf %87, %90 : vector<16x1xf32>
      %92 = arith.mulf %89, %89 : vector<16x1xf32>
      %93 = arith.subf %91, %92 : vector<16x1xf32>
      %94 = vector.broadcast %89 : vector<16x1xf32> to vector<16x768xf32>
      %95 = arith.subf %75, %94 : vector<16x768xf32>
      %cst_57 = arith.constant 9.99999974E-6 : f32
      %96 = vector.broadcast %cst_57 : f32 to vector<16x1xf32>
      %97 = arith.addf %93, %96 : vector<16x1xf32>
      %98 = math.rsqrt %97 : vector<16x1xf32>
      %99 = arith.mulf %78, %98 : vector<16x1xf32>
      %100 = vector.broadcast %99 : vector<16x1xf32> to vector<16x768xf32>
      %101 = arith.mulf %95, %100 : vector<16x768xf32>
      %102 = vector.broadcast %81 : vector<16x1xf32> to vector<16x768xf32>
      %103 = arith.addf %101, %102 : vector<16x768xf32>
      %cst_58 = arith.constant 0.000000e+00 : f32
      %104 = vector.broadcast %cst_58 : f32 to vector<16x768xf32>
      %105 = arith.cmpf oge, %103, %104 : vector<16x768xf32>
      %cst_59 = arith.constant 0.00999999977 : f32
      %106 = vector.broadcast %cst_59 : f32 to vector<16x768xf32>
      %107 = arith.mulf %106, %103 : vector<16x768xf32>
      %108 = arith.select %105, %103, %107 : vector<16x768xi1>, vector<16x768xf32>
      %109 = arith.mulf %108, %8 : vector<16x768xf32>
      %110 = arith.index_cast %arg13 : i32 to index
      %c0_60 = arith.constant 0 : index
      %c0_61 = arith.constant 0 : index
      %111 = vector.load %arg8[%110, %c0_60, %c0_61] : memref<4x8x152xf32, #tpu.memory_space<vmem>>, vector<1x8x152xf32>
      %112 = vector.shape_cast %111 : vector<1x8x152xf32> to vector<8x152xf32>
      %113 = arith.index_cast %arg13 : i32 to index
      %c0_62 = arith.constant 0 : index
      %c0_63 = arith.constant 0 : index
      %114 = vector.load %arg9[%113, %c0_62, %c0_63] : memref<4x8x1xf32, #tpu.memory_space<vmem>>, vector<1x8x1xf32>
      %115 = vector.shape_cast %114 : vector<1x8x1xf32> to vector<8x1xf32>
      %c0_64 = arith.constant 0 : index
      %c128_65 = arith.constant 128 : index
      %116 = vector.load %arg11[%c0_64, %c128_65] : memref<16x1024xf32, #tpu.memory_space<vmem>>, vector<16x768xf32>
      tpu.vector_store %arg11[%c0_64, %c128_65], %109 {strides = array<i32>} : memref<16x1024xf32, #tpu.memory_space<vmem>>, vector<16x768xf32>,
      %c0_66 = arith.constant 0 : index
      %c109_67 = arith.constant 109 : index
      %117 = vector.load %arg11[%c0_66, %c109_67] : memref<16x1024xf32, #tpu.memory_space<vmem>>, vector<16x768xf32>
      %c0_68 = arith.constant 0 : index
      %c0_69 = arith.constant 0 : index
      %118 = vector.load %arg12[%c0_68, %c0_69] : memref<152x768xf32, #tpu.memory_space<vmem>>, vector<16x768xf32>
      tpu.vector_store %arg12[%c0_68, %c0_69], %117 {strides = array<i32>} : memref<152x768xf32, #tpu.memory_space<vmem>>, vector<16x768xf32>,
      %c0_70 = arith.constant 0 : index
      %c110_71 = arith.constant 110 : index
      %119 = vector.load %arg11[%c0_70, %c110_71] : memref<16x1024xf32, #tpu.memory_space<vmem>>, vector<16x768xf32>
      %c16_72 = arith.constant 16 : index
      %c0_73 = arith.constant 0 : index
      %120 = vector.load %arg12[%c16_72, %c0_73] : memref<152x768xf32, #tpu.memory_space<vmem>>, vector<16x768xf32>
      tpu.vector_store %arg12[%c16_72, %c0_73], %119 {strides = array<i32>} : memref<152x768xf32, #tpu.memory_space<vmem>>, vector<16x768xf32>,
      %c0_74 = arith.constant 0 : index
      %c111_75 = arith.constant 111 : index
      %121 = vector.load %arg11[%c0_74, %c111_75] : memref<16x1024xf32, #tpu.memory_space<vmem>>, vector<16x768xf32>
      %c32_76 = arith.constant 32 : index
      %c0_77 = arith.constant 0 : index
      %122 = vector.load %arg12[%c32_76, %c0_77] : memref<152x768xf32, #tpu.memory_space<vmem>>, vector<16x768xf32>
      tpu.vector_store %arg12[%c32_76, %c0_77], %121 {strides = array<i32>} : memref<152x768xf32, #tpu.memory_space<vmem>>, vector<16x768xf32>,
      %c0_78 = arith.constant 0 : index
      %c127_79 = arith.constant 127 : index
      %123 = vector.load %arg11[%c0_78, %c127_79] : memref<16x1024xf32, #tpu.memory_space<vmem>>, vector<16x768xf32>
      %c48_80 = arith.constant 48 : index
      %c0_81 = arith.constant 0 : index
      %124 = vector.load %arg12[%c48_80, %c0_81] : memref<152x768xf32, #tpu.memory_space<vmem>>, vector<16x768xf32>
      tpu.vector_store %arg12[%c48_80, %c0_81], %123 {strides = array<i32>} : memref<152x768xf32, #tpu.memory_space<vmem>>, vector<16x768xf32>,
      %c0_82 = arith.constant 0 : index
      %c128_83 = arith.constant 128 : index
      %125 = vector.load %arg11[%c0_82, %c128_83] : memref<16x1024xf32, #tpu.memory_space<vmem>>, vector<16x768xf32>
      %c64_84 = arith.constant 64 : index
      %c0_85 = arith.constant 0 : index
      %126 = vector.load %arg12[%c64_84, %c0_85] : memref<152x768xf32, #tpu.memory_space<vmem>>, vector<16x768xf32>
      tpu.vector_store %arg12[%c64_84, %c0_85], %125 {strides = array<i32>} : memref<152x768xf32, #tpu.memory_space<vmem>>, vector<16x768xf32>,
      %c0_86 = arith.constant 0 : index
      %c129_87 = arith.constant 129 : index
      %127 = vector.load %arg11[%c0_86, %c129_87] : memref<16x1024xf32, #tpu.memory_space<vmem>>, vector<16x768xf32>
      %c80 = arith.constant 80 : index
      %c0_88 = arith.constant 0 : index
      %128 = vector.load %arg12[%c80, %c0_88] : memref<152x768xf32, #tpu.memory_space<vmem>>, vector<16x768xf32>
      tpu.vector_store %arg12[%c80, %c0_88], %127 {strides = array<i32>} : memref<152x768xf32, #tpu.memory_space<vmem>>, vector<16x768xf32>,
      %c0_89 = arith.constant 0 : index
      %c145_90 = arith.constant 145 : index
      %129 = vector.load %arg11[%c0_89, %c145_90] : memref<16x1024xf32, #tpu.memory_space<vmem>>, vector<16x768xf32>
      %c96 = arith.constant 96 : index
      %c0_91 = arith.constant 0 : index
      %130 = vector.load %arg12[%c96, %c0_91] : memref<152x768xf32, #tpu.memory_space<vmem>>, vector<16x768xf32>
      tpu.vector_store %arg12[%c96, %c0_91], %129 {strides = array<i32>} : memref<152x768xf32, #tpu.memory_space<vmem>>, vector<16x768xf32>,
      %c0_92 = arith.constant 0 : index
      %c146_93 = arith.constant 146 : index
      %131 = vector.load %arg11[%c0_92, %c146_93] : memref<16x1024xf32, #tpu.memory_space<vmem>>, vector<16x768xf32>
      %c112 = arith.constant 112 : index
      %c0_94 = arith.constant 0 : index
      %132 = vector.load %arg12[%c112, %c0_94] : memref<152x768xf32, #tpu.memory_space<vmem>>, vector<16x768xf32>
      tpu.vector_store %arg12[%c112, %c0_94], %131 {strides = array<i32>} : memref<152x768xf32, #tpu.memory_space<vmem>>, vector<16x768xf32>,
      %c0_95 = arith.constant 0 : index
      %c147_96 = arith.constant 147 : index
      %133 = vector.load %arg11[%c0_95, %c147_96] : memref<16x1024xf32, #tpu.memory_space<vmem>>, vector<16x768xf32>
      %c128_97 = arith.constant 128 : index
      %c0_98 = arith.constant 0 : index
      %134 = vector.load %arg12[%c128_97, %c0_98] : memref<152x768xf32, #tpu.memory_space<vmem>>, vector<16x768xf32>
      tpu.vector_store %arg12[%c128_97, %c0_98], %133 {strides = array<i32>} : memref<152x768xf32, #tpu.memory_space<vmem>>, vector<16x768xf32>,
      %c144 = arith.constant 144 : index
      %c0_99 = arith.constant 0 : index
      %135 = vector.load %arg12[%c144, %c0_99] : memref<152x768xf32, #tpu.memory_space<vmem>>, vector<8x768xf32>
      tpu.vector_store %arg12[%c144, %c0_99], %arg14 {strides = array<i32>} : memref<152x768xf32, #tpu.memory_space<vmem>>, vector<8x768xf32>,
      %c0_100 = arith.constant 0 : index
      %c0_101 = arith.constant 0 : index
      %136 = vector.load %arg12[%c0_100, %c0_101] : memref<152x768xf32, #tpu.memory_space<vmem>>, vector<152x768xf32>
      %cst_102 = arith.constant dense<0.000000e+00> : vector<8x768xf32>
      %137 = tpu.matmul %112, %136, %cst_102 {dimension_numbers = #tpu.dot_dimension_numbers<[1], [0], [0], [1], [0, 0, 1, 1], [], []>} : vector<8x152xf32>, vector<152x768xf32>, vector<8x768xf32> -> vector<8x768xf32>
      %138 = vector.broadcast %115 : vector<8x1xf32> to vector<8x768xf32>
      %139 = arith.addf %137, %138 : vector<8x768xf32>
      scf.yield %139 : vector<8x768xf32>
    }
    %c4_i32_7 = arith.constant 4 : i32
    %c0_8 = arith.constant 0 : index
    %c0_9 = arith.constant 0 : index
    %12 = vector.load %arg10[%c0_8, %c0_9] : memref<8x768xf32, #tpu.memory_space<vmem>>, vector<8x768xf32>
    tpu.vector_store %arg10[%c0_8, %c0_9], %11 {strides = array<i32>} : memref<8x768xf32, #tpu.memory_space<vmem>>, vector<8x768xf32>,
    return
  }
}

</mosaic_0001>

<llo_original>
// kernel: tpu_custom_call.1
$region0: #{tpu_custom_call.1}
  #allocation0 [shape = 'u32[]', space=smem, size = 0x4, offset = 0x4, fixed_abs, tag = 'smem constant byte address 0x4 - core index']
  #allocation1 [shape = 'u32[144,128]{1,0:T(1,128)}', space=vmem, size = 0x12000, scoped, tag = 'internal scratch']
  #allocation2 [shape = 'f32[16,1024]{1,0:T(8,128)}', space=vmem, size = 0x10000, scoped, tag = 'scratch operand']
  #allocation3 [shape = 'f32[152,768]{1,0:T(8,128)}', space=vmem, size = 0x72000, scoped, tag = 'scratch operand']
  %s0 = inlined_call_operand.vmem [shape: f32[8,768], index: 0, kind: input, shape index: {}]
  %s1 = inlined_call_operand.vmem [shape: f32[1,768], index: 1, kind: input, shape index: {}]
  %s2 = inlined_call_operand.vmem [shape: f32[4,8,1], index: 2, kind: input, shape index: {}]
  %s3 = inlined_call_operand.vmem [shape: f32[4,8,1], index: 3, kind: input, shape index: {}]
  %s4 = inlined_call_operand.vmem [shape: f32[4,16,72], index: 4, kind: input, shape index: {}]
  %s5 = inlined_call_operand.vmem [shape: f32[4,16,1], index: 5, kind: input, shape index: {}]
  %s6 = inlined_call_operand.vmem [shape: f32[4,16,1], index: 6, kind: input, shape index: {}]
  %s7 = inlined_call_operand.vmem [shape: f32[4,16,1], index: 7, kind: input, shape index: {}]
  %s8 = inlined_call_operand.vmem [shape: f32[4,8,152], index: 8, kind: input, shape index: {}]
  %s9 = inlined_call_operand.vmem [shape: f32[4,8,1], index: 9, kind: input, shape index: {}]
  %s10 = inlined_call_operand.hbm [shape: f32[8,768], index: 10, kind: output, shape index: {}]
  %s11 = sld [smem:[#allocation0]]
  $region57: #{tpu_custom_call.1} parent=0
    _
  %s13 = ssub.s32 1, %s11
  %s14 = scalar_select 0, %s13, %s11
  $region1: #{tpu_custom_call.1} parent=0
    #allocation4 [shape = 'u8[24576]{0}', space=vmem, size = 0x6000, scoped, tag = 'output window, operand 0, single buffered']
    #allocation5 [shape = 's32[1]{0}', space=sflag, size = 0x4, scoped, tag = 'scoped memory for tpu_custom_call.1']
    %15 = vsyncpa [#allocation5], 0
    // Predicated region
    $region2: #{tpu_custom_call.1} parent=1 // pred_check
      _
    $region3: #{tpu_custom_call.1} parent=1 // pred_check_branch
      %17 = sbr.rel (0) target = $region5
    $region4: #{tpu_custom_call.1} parent=1 // pred_region
      _
    $region5: #{tpu_custom_call.1} parent=1 // pred_fallthru
      _
    // Predicated region
    $region6: #{tpu_custom_call.1} parent=1 // pred_check
      _
    $region7: #{tpu_custom_call.1} parent=1 // pred_check_branch
      %19 = sbr.rel (0) target = $region9
    $region8: #{tpu_custom_call.1} parent=1 // pred_region
      _
    $region9: #{tpu_custom_call.1} parent=1 // pred_fallthru
      _
    // Predicated region
    $region10: #{tpu_custom_call.1} parent=1 // pred_check
      _
    $region11: #{tpu_custom_call.1} parent=1 // pred_check_branch
      %21 = sbr.rel (0) target = $region13
    $region12: #{tpu_custom_call.1} parent=1 // pred_region
      _
    $region13: #{tpu_custom_call.1} parent=1 // pred_fallthru
      _
    // Predicated region
    $region14: #{tpu_custom_call.1} parent=1 // pred_check
      _
    $region15: #{tpu_custom_call.1} parent=1 // pred_check_branch
      %23 = sbr.rel (0) target = $region17
    $region16: #{tpu_custom_call.1} parent=1 // pred_region
      _
    $region17: #{tpu_custom_call.1} parent=1 // pred_fallthru
      _
    // Predicated region
    $region18: #{tpu_custom_call.1} parent=1 // pred_check
      _
    $region19: #{tpu_custom_call.1} parent=1 // pred_check_branch
      %25 = sbr.rel (0) target = $region21
    $region20: #{tpu_custom_call.1} parent=1 // pred_region
      _
    $region21: #{tpu_custom_call.1} parent=1 // pred_fallthru
      _
    // Predicated region
    $region22: #{tpu_custom_call.1} parent=1 // pred_check
      _
    $region23: #{tpu_custom_call.1} parent=1 // pred_check_branch
      %27 = sbr.rel (0) target = $region25
    $region24: #{tpu_custom_call.1} parent=1 // pred_region
      _
    $region25: #{tpu_custom_call.1} parent=1 // pred_fallthru
      _
    // Predicated region
    $region26: #{tpu_custom_call.1} parent=1 // pred_check
      _
    $region27: #{tpu_custom_call.1} parent=1 // pred_check_branch
      %29 = sbr.rel (0) target = $region29
    $region28: #{tpu_custom_call.1} parent=1 // pred_region
      _
    $region29: #{tpu_custom_call.1} parent=1 // pred_fallthru
      _
    // Predicated region
    $region30: #{tpu_custom_call.1} parent=1 // pred_check
      _
    $region31: #{tpu_custom_call.1} parent=1 // pred_check_branch
      %31 = sbr.rel (0) target = $region33
    $region32: #{tpu_custom_call.1} parent=1 // pred_region
      _
    $region33: #{tpu_custom_call.1} parent=1 // pred_fallthru
      _
    // Predicated region
    $region34: #{tpu_custom_call.1} parent=1 // pred_check
      _
    $region35: #{tpu_custom_call.1} parent=1 // pred_check_branch
      %33 = sbr.rel (0) target = $region37
    $region36: #{tpu_custom_call.1} parent=1 // pred_region
      _
    $region37: #{tpu_custom_call.1} parent=1 // pred_fallthru
      _
    // Predicated region
    $region38: #{tpu_custom_call.1} parent=1 // pred_check
      _
    $region39: #{tpu_custom_call.1} parent=1 // pred_check_branch
      %35 = sbr.rel (0) target = $region41
    $region40: #{tpu_custom_call.1} parent=1 // pred_region
      _
    $region41: #{tpu_custom_call.1} parent=1 // pred_fallthru
      _
    %36 = vst [vmem:[#allocation2] sm:$0xff] 0.0
    %37 = vst [vmem:[#allocation2 + $0x40] sm:$0xff] 0.0
    %38 = vst [vmem:[#allocation2 + $0x38] sm:$0xff] 0.0
    %39 = vst [vmem:[#allocation2 + $0x78] sm:$0xff] 0.0
    %v40 = vld [vmem:[%s1] sm:$0x3f]
    %v42 = vlaneseq
    %v43 = vshrl.u32 %v42, 7
    %v44 = vsub.s32 0, %v43
    %v45 = vrot.slane %v40, %v44
    %v46 = vlaneseq
    %v47 = vshrl.u32 %v46, 7
    %v48 = vsub.s32 1, %v47
    %v49 = vrot.slane %v40, %v48
    %v50 = vlaneseq
    %v51 = vshrl.u32 %v50, 7
    %v52 = vsub.s32 2, %v51
    %v53 = vrot.slane %v40, %v52
    %v54 = vlaneseq
    %v55 = vshrl.u32 %v54, 7
    %v56 = vsub.s32 3, %v55
    %v57 = vrot.slane %v40, %v56
    %v58 = vlaneseq
    %v59 = vshrl.u32 %v58, 7
    %v60 = vsub.s32 4, %v59
    %v61 = vrot.slane %v40, %v60
    %v62 = vlaneseq
    %v63 = vshrl.u32 %v62, 7
    %v64 = vsub.s32 5, %v63
    %v65 = vrot.slane %v40, %v64
    %v72 = vld [vmem:[%s0] sm:$0xff]
    %v73 = vld [vmem:[%s0 + $0x8] sm:$0xff]
    %v74 = vld [vmem:[%s0 + $0x10] sm:$0xff]
    %v75 = vld [vmem:[%s0 + $0x18] sm:$0xff]
    %v76 = vld [vmem:[%s0 + $0x20] sm:$0xff]
    %v77 = vld [vmem:[%s0 + $0x28] sm:$0xff]
    loop: start=0, step=1, limit=4
    $region42: #{tpu_custom_call.1} parent=1 // loop_pre_header
      _
    $region43: #{tpu_custom_call.1} parent=1 // loop_header
      %s79 = sphi 0, %s83
      %p80 = scmp.ge.s32.totalorder %s79, 4
      %v84 = vphi %v72, %v2034
      %v85 = vphi %v73, %v2036
      %v86 = vphi %v74, %v2105
      %v87 = vphi %v75, %v2107
      %v88 = vphi %v76, %v2176
      %v89 = vphi %v77, %v2178
    $region44: #{tpu_custom_call.1} parent=1 // loop_header_branch
      %82 = sbr.rel (%p80) target = $region48
    $region45: #{tpu_custom_call.1} parent=1 // loop_body
      %s90 = smul.u32 %s79, 8
      %s91 = scalar_lea.vmem %s2, %s90
      %v92 = vld [vmem:[%s91] sm:$0xff]
      %s93 = scalar_lea.vmem %s3, %s90
      %v94 = vld [vmem:[%s93] sm:$0xff]
      %v95 = vmul.f32 %v84, %v45
      %v96 = vmul.f32 %v85, %v49
      %v97 = vmul.f32 %v86, %v53
      %v98 = vmul.f32 %v87, %v57
      %v99 = vmul.f32 %v88, %v61
      %v100 = vmul.f32 %v89, %v65
      %v101 = vadd.f32 %v95, %v96
      %v102 = vadd.f32 %v101, %v97
      %v103 = vadd.f32 %v102, %v98
      %v104 = vadd.f32 %v103, %v99
      %v105 = vadd.f32 %v104, %v100
      %106 = vadd.xlane.f32.xlu0 %v105
      %v107 = vpop.xlane.xlu0 %106
      %v108 = vmul.f32 %v95, %v84
      %v109 = vmul.f32 %v96, %v85
      %v110 = vmul.f32 %v97, %v86
      %v111 = vmul.f32 %v98, %v87
      %v112 = vmul.f32 %v99, %v88
      %v113 = vmul.f32 %v100, %v89
      %v114 = vadd.f32 %v108, %v109
      %v115 = vadd.f32 %v114, %v110
      %v116 = vadd.f32 %v115, %v111
      %v117 = vadd.f32 %v116, %v112
      %v118 = vadd.f32 %v117, %v113
      %119 = vadd.xlane.f32.xlu0 %v118
      %v120 = vpop.xlane.xlu0 %119
      %v121 = vmul.f32 %v107, 0.001953125
      %v122 = vmul.f32 %v120, 0.001953125
      %v123 = vmul.f32 %v121, %v121
      %v124 = vsub.f32 %v122, %v123
      %v125 = vsub.f32 %v84, %v121
      %v126 = vsub.f32 %v85, %v121
      %v127 = vsub.f32 %v86, %v121
      %v128 = vsub.f32 %v87, %v121
      %v129 = vsub.f32 %v88, %v121
      %v130 = vsub.f32 %v89, %v121
      %v131 = vadd.f32 %v124, 1e-05
      %v132 = vrsqrt.pop %v131
      %v133 = vmul.f32 %v92, %v132
      %135 = vset.pattern.permute.xlu0 0
      %136 = vperm.xlu0 %135, %v133
      %v137 = vpop.permute.xlu0 %136
      %v139 = vmul.f32 %v125, %v137
      %v140 = vmul.f32 %v126, %v137
      %v141 = vmul.f32 %v127, %v137
      %v142 = vmul.f32 %v128, %v137
      %v143 = vmul.f32 %v129, %v137
      %v144 = vmul.f32 %v130, %v137
      %146 = vset.pattern.permute.xlu0 0
      %147 = vperm.xlu0 %146, %v94
      %v148 = vpop.permute.xlu0 %147
      %v150 = vadd.f32 %v139, %v148
      %v151 = vadd.f32 %v140, %v148
      %v152 = vadd.f32 %v141, %v148
      %v153 = vadd.f32 %v142, %v148
      %v154 = vadd.f32 %v143, %v148
      %v155 = vadd.f32 %v144, %v148
      %vm156 = vcmp.ge.f32.partialorder %v150, 0.0
      %vm157 = vcmp.ge.f32.partialorder %v151, 0.0
      %vm158 = vcmp.ge.f32.partialorder %v152, 0.0
      %vm159 = vcmp.ge.f32.partialorder %v153, 0.0
      %vm160 = vcmp.ge.f32.partialorder %v154, 0.0
      %vm161 = vcmp.ge.f32.partialorder %v155, 0.0
      %v162 = vmul.f32 %v150, 0.01
      %v163 = vmul.f32 %v151, 0.01
      %v164 = vmul.f32 %v152, 0.01
      %v165 = vmul.f32 %v153, 0.01
      %v166 = vmul.f32 %v154, 0.01
      %v167 = vmul.f32 %v155, 0.01
      %v168 = vsel %vm156, %v150, %v162
      %v169 = vsel %vm157, %v151, %v163
      %v170 = vsel %vm158, %v152, %v164
      %v171 = vsel %vm159, %v153, %v165
      %v172 = vsel %vm160, %v154, %v166
      %v173 = vsel %vm161, %v155, %v167
      %v174 = vmul.f32 %v168, %v45
      %v175 = vmul.f32 %v169, %v49
      %v176 = vmul.f32 %v170, %v53
      %v177 = vmul.f32 %v171, %v57
      %v178 = vmul.f32 %v172, %v61
      %v179 = vmul.f32 %v173, %v65
      %s180 = smul.u32 %s79, 16
      %s181 = scalar_lea.vmem %s4, %s180
      %v182 = vld [vmem:[%s181] sm:$0xff]
      %v183 = vld [vmem:[%s181 + $0x8] sm:$0xff]
      %s184 = scalar_lea.vmem %s5, %s180
      %v185 = vld [vmem:[%s184] sm:$0xff]
      %v186 = vld [vmem:[%s184 + $0x8] sm:$0xff]
      %187 = vst [vmem:[#allocation2 + $0x8] sm:$0xff] %v174
      %188 = vst [vmem:[#allocation2 + $0x10] sm:$0xff] %v175
      %189 = vst [vmem:[#allocation2 + $0x18] sm:$0xff] %v176
      %190 = vst [vmem:[#allocation2 + $0x20] sm:$0xff] %v177
      %191 = vst [vmem:[#allocation2 + $0x28] sm:$0xff] %v178
      %192 = vst [vmem:[#allocation2 + $0x30] sm:$0xff] %v179
      %v193 = vld [vmem:[#allocation2] sm:$0xff]
      %v194 = vld [vmem:[#allocation2 + $0x8] sm:$0xff]
      %v195 = vld [vmem:[#allocation2 + $0x10] sm:$0xff]
      %v196 = vld [vmem:[#allocation2 + $0x18] sm:$0xff]
      %v197 = vld [vmem:[#allocation2 + $0x20] sm:$0xff]
      %v198 = vld [vmem:[#allocation2 + $0x28] sm:$0xff]
      %v199 = vld [vmem:[#allocation2 + $0x30] sm:$0xff]
      %207 = vrot.lane.b32.xlu0 %v193, 19
      %v208 = vpop.permute.xlu0 %207
      %209 = vrot.lane.b32.xlu0 %v194, 19
      %v210 = vpop.permute.xlu0 %209
      %211 = vrot.lane.b32.xlu0 %v195, 19
      %v212 = vpop.permute.xlu0 %211
      %213 = vrot.lane.b32.xlu0 %v196, 19
      %v214 = vpop.permute.xlu0 %213
      %215 = vrot.lane.b32.xlu0 %v197, 19
      %v216 = vpop.permute.xlu0 %215
      %217 = vrot.lane.b32.xlu0 %v198, 19
      %v218 = vpop.permute.xlu0 %217
      %219 = vrot.lane.b32.xlu0 %v199, 19
      %v220 = vpop.permute.xlu0 %219
      %vm221 = vcmask 154624
      %v222 = vsel %vm221, %v208, %v210
      %v223 = vsel %vm221, %v210, %v212
      %v224 = vsel %vm221, %v212, %v214
      %v225 = vsel %vm221, %v214, %v216
      %v226 = vsel %vm221, %v216, %v218
      %v227 = vsel %vm221, %v218, %v220
      %234 = vst [vmem:[#allocation3] sm:$0xff] %v222
      %235 = vst [vmem:[#allocation3 + $0x8] sm:$0xff] %v223
      %236 = vst [vmem:[#allocation3 + $0x10] sm:$0xff] %v224
      %237 = vst [vmem:[#allocation3 + $0x18] sm:$0xff] %v225
      %238 = vst [vmem:[#allocation3 + $0x20] sm:$0xff] %v226
      %239 = vst [vmem:[#allocation3 + $0x28] sm:$0xff] %v227
      %v240 = vld [vmem:[#allocation2] sm:$0xff]
      %v241 = vld [vmem:[#allocation2 + $0x8] sm:$0xff]
      %v242 = vld [vmem:[#allocation2 + $0x10] sm:$0xff]
      %v243 = vld [vmem:[#allocation2 + $0x18] sm:$0xff]
      %v244 = vld [vmem:[#allocation2 + $0x20] sm:$0xff]
      %v245 = vld [vmem:[#allocation2 + $0x28] sm:$0xff]
      %v246 = vld [vmem:[#allocation2 + $0x30] sm:$0xff]
      %254 = vrot.lane.b32.xlu0 %v240, 18
      %v255 = vpop.permute.xlu0 %254
      %256 = vrot.lane.b32.xlu0 %v241, 18
      %v257 = vpop.permute.xlu0 %256
      %258 = vrot.lane.b32.xlu0 %v242, 18
      %v259 = vpop.permute.xlu0 %258
      %260 = vrot.lane.b32.xlu0 %v243, 18
      %v261 = vpop.permute.xlu0 %260
      %262 = vrot.lane.b32.xlu0 %v244, 18
      %v263 = vpop.permute.xlu0 %262
      %264 = vrot.lane.b32.xlu0 %v245, 18
      %v265 = vpop.permute.xlu0 %264
      %266 = vrot.lane.b32.xlu0 %v246, 18
      %v267 = vpop.permute.xlu0 %266
      %vm268 = vcmask 146432
      %v269 = vsel %vm268, %v255, %v257
      %v270 = vsel %vm268, %v257, %v259
      %v271 = vsel %vm268, %v259, %v261
      %v272 = vsel %vm268, %v261, %v263
      %v273 = vsel %vm268, %v263, %v265
      %v274 = vsel %vm268, %v265, %v267
      %281 = vst [vmem:[#allocation3 + $0x30] sm:$0xff] %v269
      %282 = vst [vmem:[#allocation3 + $0x38] sm:$0xff] %v270
      %283 = vst [vmem:[#allocation3 + $0x40] sm:$0xff] %v271
      %284 = vst [vmem:[#allocation3 + $0x48] sm:$0xff] %v272
      %285 = vst [vmem:[#allocation3 + $0x50] sm:$0xff] %v273
      %286 = vst [vmem:[#allocation3 + $0x58] sm:$0xff] %v274
      %v287 = vld [vmem:[#allocation2] sm:$0xff]
      %v288 = vld [vmem:[#allocation2 + $0x8] sm:$0xff]
      %v289 = vld [vmem:[#allocation2 + $0x10] sm:$0xff]
      %v290 = vld [vmem:[#allocation2 + $0x18] sm:$0xff]
      %v291 = vld [vmem:[#allocation2 + $0x20] sm:$0xff]
      %v292 = vld [vmem:[#allocation2 + $0x28] sm:$0xff]
      %v293 = vld [vmem:[#allocation2 + $0x30] sm:$0xff]
      %301 = vrot.lane.b32.xlu0 %v287, 17
      %v302 = vpop.permute.xlu0 %301
      %303 = vrot.lane.b32.xlu0 %v288, 17
      %v304 = vpop.permute.xlu0 %303
      %305 = vrot.lane.b32.xlu0 %v289, 17
      %v306 = vpop.permute.xlu0 %305
      %307 = vrot.lane.b32.xlu0 %v290, 17
      %v308 = vpop.permute.xlu0 %307
      %309 = vrot.lane.b32.xlu0 %v291, 17
      %v310 = vpop.permute.xlu0 %309
      %311 = vrot.lane.b32.xlu0 %v292, 17
      %v312 = vpop.permute.xlu0 %311
      %313 = vrot.lane.b32.xlu0 %v293, 17
      %v314 = vpop.permute.xlu0 %313
      %vm315 = vcmask 138240
      %v316 = vsel %vm315, %v302, %v304
      %v317 = vsel %vm315, %v304, %v306
      %v318 = vsel %vm315, %v306, %v308
      %v319 = vsel %vm315, %v308, %v310
      %v320 = vsel %vm315, %v310, %v312
      %v321 = vsel %vm315, %v312, %v314
      %328 = vst [vmem:[#allocation3 + $0x60] sm:$0xff] %v316
      %329 = vst [vmem:[#allocation3 + $0x68] sm:$0xff] %v317
      %330 = vst [vmem:[#allocation3 + $0x70] sm:$0xff] %v318
      %331 = vst [vmem:[#allocation3 + $0x78] sm:$0xff] %v319
      %332 = vst [vmem:[#allocation3 + $0x80] sm:$0xff] %v320
      %333 = vst [vmem:[#allocation3 + $0x88] sm:$0xff] %v321
      %v334 = vld [vmem:[#allocation2] sm:$0xff]
      %v335 = vld [vmem:[#allocation2 + $0x8] sm:$0xff]
      %v336 = vld [vmem:[#allocation2 + $0x10] sm:$0xff]
      %v337 = vld [vmem:[#allocation2 + $0x18] sm:$0xff]
      %v338 = vld [vmem:[#allocation2 + $0x20] sm:$0xff]
      %v339 = vld [vmem:[#allocation2 + $0x28] sm:$0xff]
      %v340 = vld [vmem:[#allocation2 + $0x30] sm:$0xff]
      %348 = vrot.lane.b32.xlu0 %v334, 1
      %v349 = vpop.permute.xlu0 %348
      %350 = vrot.lane.b32.xlu0 %v335, 1
      %v351 = vpop.permute.xlu0 %350
      %352 = vrot.lane.b32.xlu0 %v336, 1
      %v353 = vpop.permute.xlu0 %352
      %354 = vrot.lane.b32.xlu0 %v337, 1
      %v355 = vpop.permute.xlu0 %354
      %356 = vrot.lane.b32.xlu0 %v338, 1
      %v357 = vpop.permute.xlu0 %356
      %358 = vrot.lane.b32.xlu0 %v339, 1
      %v359 = vpop.permute.xlu0 %358
      %360 = vrot.lane.b32.xlu0 %v340, 1
      %v361 = vpop.permute.xlu0 %360
      %vm362 = vcmask 7168
      %v363 = vsel %vm362, %v349, %v351
      %v364 = vsel %vm362, %v351, %v353
      %v365 = vsel %vm362, %v353, %v355
      %v366 = vsel %vm362, %v355, %v357
      %v367 = vsel %vm362, %v357, %v359
      %v368 = vsel %vm362, %v359, %v361
      %375 = vst [vmem:[#allocation3 + $0x90] sm:$0xff] %v363
      %376 = vst [vmem:[#allocation3 + $0x98] sm:$0xff] %v364
      %377 = vst [vmem:[#allocation3 + $0xa0] sm:$0xff] %v365
      %378 = vst [vmem:[#allocation3 + $0xa8] sm:$0xff] %v366
      %379 = vst [vmem:[#allocation3 + $0xb0] sm:$0xff] %v367
      %380 = vst [vmem:[#allocation3 + $0xb8] sm:$0xff] %v368
      %v381 = vld [vmem:[#allocation2 + $0x8] sm:$0xff]
      %v382 = vld [vmem:[#allocation2 + $0x10] sm:$0xff]
      %v383 = vld [vmem:[#allocation2 + $0x18] sm:$0xff]
      %v384 = vld [vmem:[#allocation2 + $0x20] sm:$0xff]
      %v385 = vld [vmem:[#allocation2 + $0x28] sm:$0xff]
      %v386 = vld [vmem:[#allocation2 + $0x30] sm:$0xff]
      %387 = vst [vmem:[#allocation3 + $0xc0] sm:$0xff] %v381
      %388 = vst [vmem:[#allocation3 + $0xc8] sm:$0xff] %v382
      %389 = vst [vmem:[#allocation3 + $0xd0] sm:$0xff] %v383
      %390 = vst [vmem:[#allocation3 + $0xd8] sm:$0xff] %v384
      %391 = vst [vmem:[#allocation3 + $0xe0] sm:$0xff] %v385
      %392 = vst [vmem:[#allocation3 + $0xe8] sm:$0xff] %v386
      %v393 = vld [vmem:[#allocation2 + $0x8] sm:$0xff]
      %v394 = vld [vmem:[#allocation2 + $0x10] sm:$0xff]
      %v395 = vld [vmem:[#allocation2 + $0x18] sm:$0xff]
      %v396 = vld [vmem:[#allocation2 + $0x20] sm:$0xff]
      %v397 = vld [vmem:[#allocation2 + $0x28] sm:$0xff]
      %v398 = vld [vmem:[#allocation2 + $0x30] sm:$0xff]
      %v399 = vld [vmem:[#allocation2 + $0x38] sm:$0xff]
      %407 = vrot.lane.b32.xlu0 %v393, 127
      %v408 = vpop.permute.xlu0 %407
      %409 = vrot.lane.b32.xlu0 %v394, 127
      %v410 = vpop.permute.xlu0 %409
      %411 = vrot.lane.b32.xlu0 %v395, 127
      %v412 = vpop.permute.xlu0 %411
      %413 = vrot.lane.b32.xlu0 %v396, 127
      %v414 = vpop.permute.xlu0 %413
      %415 = vrot.lane.b32.xlu0 %v397, 127
      %v416 = vpop.permute.xlu0 %415
      %417 = vrot.lane.b32.xlu0 %v398, 127
      %v418 = vpop.permute.xlu0 %417
      %419 = vrot.lane.b32.xlu0 %v399, 127
      %v420 = vpop.permute.xlu0 %419
      %vm421 = vcmask 1039360
      %v422 = vsel %vm421, %v408, %v410
      %v423 = vsel %vm421, %v410, %v412
      %v424 = vsel %vm421, %v412, %v414
      %v425 = vsel %vm421, %v414, %v416
      %v426 = vsel %vm421, %v416, %v418
      %v427 = vsel %vm421, %v418, %v420
      %434 = vst [vmem:[#allocation3 + $0xf0] sm:$0xff] %v422
      %435 = vst [vmem:[#allocation3 + $0xf8] sm:$0xff] %v423
      %436 = vst [vmem:[#allocation3 + $0x100] sm:$0xff] %v424
      %437 = vst [vmem:[#allocation3 + $0x108] sm:$0xff] %v425
      %438 = vst [vmem:[#allocation3 + $0x110] sm:$0xff] %v426
      %439 = vst [vmem:[#allocation3 + $0x118] sm:$0xff] %v427
      %v440 = vld [vmem:[#allocation2 + $0x8] sm:$0xff]
      %v441 = vld [vmem:[#allocation2 + $0x10] sm:$0xff]
      %v442 = vld [vmem:[#allocation2 + $0x18] sm:$0xff]
      %v443 = vld [vmem:[#allocation2 + $0x20] sm:$0xff]
      %v444 = vld [vmem:[#allocation2 + $0x28] sm:$0xff]
      %v445 = vld [vmem:[#allocation2 + $0x30] sm:$0xff]
      %v446 = vld [vmem:[#allocation2 + $0x38] sm:$0xff]
      %454 = vrot.lane.b32.xlu0 %v440, 111
      %v455 = vpop.permute.xlu0 %454
      %456 = vrot.lane.b32.xlu0 %v441, 111
      %v457 = vpop.permute.xlu0 %456
      %458 = vrot.lane.b32.xlu0 %v442, 111
      %v459 = vpop.permute.xlu0 %458
      %460 = vrot.lane.b32.xlu0 %v443, 111
      %v461 = vpop.permute.xlu0 %460
      %462 = vrot.lane.b32.xlu0 %v444, 111
      %v463 = vpop.permute.xlu0 %462
      %464 = vrot.lane.b32.xlu0 %v445, 111
      %v465 = vpop.permute.xlu0 %464
      %466 = vrot.lane.b32.xlu0 %v446, 111
      %v467 = vpop.permute.xlu0 %466
      %vm468 = vcmask 908288
      %v469 = vsel %vm468, %v455, %v457
      %v470 = vsel %vm468, %v457, %v459
      %v471 = vsel %vm468, %v459, %v461
      %v472 = vsel %vm468, %v461, %v463
      %v473 = vsel %vm468, %v463, %v465
      %v474 = vsel %vm468, %v465, %v467
      %481 = vst [vmem:[#allocation3 + $0x120] sm:$0xff] %v469
      %482 = vst [vmem:[#allocation3 + $0x128] sm:$0xff] %v470
      %483 = vst [vmem:[#allocation3 + $0x130] sm:$0xff] %v471
      %484 = vst [vmem:[#allocation3 + $0x138] sm:$0xff] %v472
      %485 = vst [vmem:[#allocation3 + $0x140] sm:$0xff] %v473
      %486 = vst [vmem:[#allocation3 + $0x148] sm:$0xff] %v474
      %v487 = vld [vmem:[#allocation2 + $0x8] sm:$0xff]
      %v488 = vld [vmem:[#allocation2 + $0x10] sm:$0xff]
      %v489 = vld [vmem:[#allocation2 + $0x18] sm:$0xff]
      %v490 = vld [vmem:[#allocation2 + $0x20] sm:$0xff]
      %v491 = vld [vmem:[#allocation2 + $0x28] sm:$0xff]
      %v492 = vld [vmem:[#allocation2 + $0x30] sm:$0xff]
      %v493 = vld [vmem:[#allocation2 + $0x38] sm:$0xff]
      %501 = vrot.lane.b32.xlu0 %v487, 110
      %v502 = vpop.permute.xlu0 %501
      %503 = vrot.lane.b32.xlu0 %v488, 110
      %v504 = vpop.permute.xlu0 %503
      %505 = vrot.lane.b32.xlu0 %v489, 110
      %v506 = vpop.permute.xlu0 %505
      %507 = vrot.lane.b32.xlu0 %v490, 110
      %v508 = vpop.permute.xlu0 %507
      %509 = vrot.lane.b32.xlu0 %v491, 110
      %v510 = vpop.permute.xlu0 %509
      %511 = vrot.lane.b32.xlu0 %v492, 110
      %v512 = vpop.permute.xlu0 %511
      %513 = vrot.lane.b32.xlu0 %v493, 110
      %v514 = vpop.permute.xlu0 %513
      %vm515 = vcmask 900096
      %v516 = vsel %vm515, %v502, %v504
      %v517 = vsel %vm515, %v504, %v506
      %v518 = vsel %vm515, %v506, %v508
      %v519 = vsel %vm515, %v508, %v510
      %v520 = vsel %vm515, %v510, %v512
      %v521 = vsel %vm515, %v512, %v514
      %528 = vst [vmem:[#allocation3 + $0x150] sm:$0xff] %v516
      %529 = vst [vmem:[#allocation3 + $0x158] sm:$0xff] %v517
      %530 = vst [vmem:[#allocation3 + $0x160] sm:$0xff] %v518
      %531 = vst [vmem:[#allocation3 + $0x168] sm:$0xff] %v519
      %532 = vst [vmem:[#allocation3 + $0x170] sm:$0xff] %v520
      %533 = vst [vmem:[#allocation3 + $0x178] sm:$0xff] %v521
      %v534 = vld [vmem:[#allocation2 + $0x8] sm:$0xff]
      %v535 = vld [vmem:[#allocation2 + $0x10] sm:$0xff]
      %v536 = vld [vmem:[#allocation2 + $0x18] sm:$0xff]
      %v537 = vld [vmem:[#allocation2 + $0x20] sm:$0xff]
      %v538 = vld [vmem:[#allocation2 + $0x28] sm:$0xff]
      %v539 = vld [vmem:[#allocation2 + $0x30] sm:$0xff]
      %v540 = vld [vmem:[#allocation2 + $0x38] sm:$0xff]
      %548 = vrot.lane.b32.xlu0 %v534, 109
      %v549 = vpop.permute.xlu0 %548
      %550 = vrot.lane.b32.xlu0 %v535, 109
      %v551 = vpop.permute.xlu0 %550
      %552 = vrot.lane.b32.xlu0 %v536, 109
      %v553 = vpop.permute.xlu0 %552
      %554 = vrot.lane.b32.xlu0 %v537, 109
      %v555 = vpop.permute.xlu0 %554
      %556 = vrot.lane.b32.xlu0 %v538, 109
      %v557 = vpop.permute.xlu0 %556
      %558 = vrot.lane.b32.xlu0 %v539, 109
      %v559 = vpop.permute.xlu0 %558
      %560 = vrot.lane.b32.xlu0 %v540, 109
      %v561 = vpop.permute.xlu0 %560
      %vm562 = vcmask 891904
      %v563 = vsel %vm562, %v549, %v551
      %v564 = vsel %vm562, %v551, %v553
      %v565 = vsel %vm562, %v553, %v555
      %v566 = vsel %vm562, %v555, %v557
      %v567 = vsel %vm562, %v557, %v559
      %v568 = vsel %vm562, %v559, %v561
      %575 = vst [vmem:[#allocation3 + $0x180] sm:$0xff] %v563
      %576 = vst [vmem:[#allocation3 + $0x188] sm:$0xff] %v564
      %577 = vst [vmem:[#allocation3 + $0x190] sm:$0xff] %v565
      %578 = vst [vmem:[#allocation3 + $0x198] sm:$0xff] %v566
      %579 = vst [vmem:[#allocation3 + $0x1a0] sm:$0xff] %v567
      %580 = vst [vmem:[#allocation3 + $0x1a8] sm:$0xff] %v568
      %v581 = vld [vmem:[#allocation3] sm:$0xff]
      %v582 = vld [vmem:[#allocation3 + $0x8] sm:$0xff]
      %v583 = vld [vmem:[#allocation3 + $0x10] sm:$0xff]
      %v584 = vld [vmem:[#allocation3 + $0x18] sm:$0xff]
      %v585 = vld [vmem:[#allocation3 + $0x20] sm:$0xff]
      %v586 = vld [vmem:[#allocation3 + $0x28] sm:$0xff]
      %v587 = vld [vmem:[#allocation3 + $0x30] sm:$0xff]
      %v588 = vld [vmem:[#allocation3 + $0x38] sm:$0xff]
      %v589 = vld [vmem:[#allocation3 + $0x40] sm:$0xff]
      %v590 = vld [vmem:[#allocation3 + $0x48] sm:$0xff]
      %v591 = vld [vmem:[#allocation3 + $0x50] sm:$0xff]
      %v592 = vld [vmem:[#allocation3 + $0x58] sm:$0xff]
      %v593 = vld [vmem:[#allocation3 + $0x60] sm:$0xff]
      %v594 = vld [vmem:[#allocation3 + $0x68] sm:$0xff]
      %v595 = vld [vmem:[#allocation3 + $0x70] sm:$0xff]
      %v596 = vld [vmem:[#allocation3 + $0x78] sm:$0xff]
      %v597 = vld [vmem:[#allocation3 + $0x80] sm:$0xff]
      %v598 = vld [vmem:[#allocation3 + $0x88] sm:$0xff]
      %v599 = vld [vmem:[#allocation3 + $0x90] sm:$0xff]
      %v600 = vld [vmem:[#allocation3 + $0x98] sm:$0xff]
      %v601 = vld [vmem:[#allocation3 + $0xa0] sm:$0xff]
      %v602 = vld [vmem:[#allocation3 + $0xa8] sm:$0xff]
      %v603 = vld [vmem:[#allocation3 + $0xb0] sm:$0xff]
      %v604 = vld [vmem:[#allocation3 + $0xb8] sm:$0xff]
      %v605 = vld [vmem:[#allocation3 + $0xc0] sm:$0xff]
      %v606 = vld [vmem:[#allocation3 + $0xc8] sm:$0xff]
      %v607 = vld [vmem:[#allocation3 + $0xd0] sm:$0xff]
      %v608 = vld [vmem:[#allocation3 + $0xd8] sm:$0xff]
      %v609 = vld [vmem:[#allocation3 + $0xe0] sm:$0xff]
      %v610 = vld [vmem:[#allocation3 + $0xe8] sm:$0xff]
      %v611 = vld [vmem:[#allocation3 + $0xf0] sm:$0xff]
      %v612 = vld [vmem:[#allocation3 + $0xf8] sm:$0xff]
      %v613 = vld [vmem:[#allocation3 + $0x100] sm:$0xff]
      %v614 = vld [vmem:[#allocation3 + $0x108] sm:$0xff]
      %v615 = vld [vmem:[#allocation3 + $0x110] sm:$0xff]
      %v616 = vld [vmem:[#allocation3 + $0x118] sm:$0xff]
      %v617 = vld [vmem:[#allocation3 + $0x120] sm:$0xff]
      %v618 = vld [vmem:[#allocation3 + $0x128] sm:$0xff]
      %v619 = vld [vmem:[#allocation3 + $0x130] sm:$0xff]
      %v620 = vld [vmem:[#allocation3 + $0x138] sm:$0xff]
      %v621 = vld [vmem:[#allocation3 + $0x140] sm:$0xff]
      %v622 = vld [vmem:[#allocation3 + $0x148] sm:$0xff]
      %v623 = vld [vmem:[#allocation3 + $0x150] sm:$0xff]
      %v624 = vld [vmem:[#allocation3 + $0x158] sm:$0xff]
      %v625 = vld [vmem:[#allocation3 + $0x160] sm:$0xff]
      %v626 = vld [vmem:[#allocation3 + $0x168] sm:$0xff]
      %v627 = vld [vmem:[#allocation3 + $0x170] sm:$0xff]
      %v628 = vld [vmem:[#allocation3 + $0x178] sm:$0xff]
      %v629 = vld [vmem:[#allocation3 + $0x180] sm:$0xff]
      %v630 = vld [vmem:[#allocation3 + $0x188] sm:$0xff]
      %v631 = vld [vmem:[#allocation3 + $0x190] sm:$0xff]
      %v632 = vld [vmem:[#allocation3 + $0x198] sm:$0xff]
      %v633 = vld [vmem:[#allocation3 + $0x1a0] sm:$0xff]
      %v634 = vld [vmem:[#allocation3 + $0x1a8] sm:$0xff]
      %636 = vset.pattern.permute.xlu0 0
      %637 = vperm.xlu0 %636, %v185
      %v638 = vpop.permute.xlu0 %637
      %641 = vset.pattern.permute.xlu0 0
      %642 = vperm.xlu0 %641, %v186
      %v643 = vpop.permute.xlu0 %642
      %vm645 = vcmask 588800
      %v647 = vsel %vm645, %v182, 0
      %v650 = vsel %vm645, %v183, 0
      %652 = vmatprep.subr.mxu0 %v582
      %653 = vmatpush1.msra.mxu0 %v581
      %654 = vmatprep.subr.mxu0 %v588
      %655 = vmatpush1.msra.mxu0 %v587
      %656 = vmatprep.subr.mxu0 %v594
      %657 = vmatpush1.msra.mxu0 %v593
      %658 = vmatprep.subr.mxu0 %v600
      %659 = vmatpush1.msra.mxu0 %v599
      %660 = vmatprep.subr.mxu0 %v606
      %661 = vmatpush1.msra.mxu0 %v605
      %662 = vmatprep.subr.mxu0 %v612
      %663 = vmatpush1.msra.mxu0 %v611
      %664 = vmatprep.subr.mxu0 %v618
      %665 = vmatpush1.msra.mxu0 %v617
      %666 = vmatprep.subr.mxu0 %v624
      %667 = vmatpush1.msra.mxu0 %v623
      %668 = vmatprep.subr.mxu0 %v630
      %669 = vmatpush1.msra.mxu0 %v629
      %670 = vmatprep.subr.mxu0 0.0
      %671 = vmatpush1.msra.mxu0 0.0
      %672 = vmatprep.subr.mxu0 0.0
      %673 = vmatpush1.msra.mxu0 0.0
      %674 = vmatprep.subr.mxu0 0.0
      %675 = vmatpush1.msra.mxu0 0.0
      %676 = vmatprep.subr.mxu0 0.0
      %677 = vmatpush1.msra.mxu0 0.0
      %678 = vmatprep.subr.mxu0 0.0
      %679 = vmatpush1.msra.mxu0 0.0
      %680 = vmatprep.subr.mxu0 0.0
      %681 = vmatpush1.msra.mxu0 0.0
      %682 = vmatprep.subr.mxu0 0.0
      %683 = vmatpush1.msra.mxu0 0.0
      %684 = vmatprep.subr.mxu0 0.0
      %685 = vmatpush1.msra.mxu0 0.0
      %686 = vmatprep.subr.mxu0 0.0
      %687 = vmatpush1.msra.mxu0 0.0
      %688 = vmatprep.subr.mxu0 0.0
      %689 = vmatpush1.msra.mxu0 0.0
      %690 = vmatprep.subr.mxu0 0.0
      %691 = vmatpush1.msra.mxu0 0.0
      %692 = vmatprep.subr.mxu0 0.0
      %693 = vmatpush1.msra.mxu0 0.0
      %694 = vmatprep.subr.mxu0 0.0
      %695 = vmatpush1.msra.mxu0 0.0
      %696 = vmatprep.subr.mxu0 0.0
      %697 = vmatpush1.msra.mxu0 0.0
      %698 = vmatprep.subr.mxu0 0.0
      %699 = vmatpush1.msra.mxu0 0.0
      %700 = vmatprep.subr.mxu0 0.0
      %701 = vmatpush1.msra.mxu0 0.0
      %702 = vmatprep.subr.mxu0 0.0
      %703 = vmatpush1.msra.mxu0 0.0
      %704 = vmatprep.subr.mxu0 0.0
      %705 = vmatpush1.msra.mxu0 0.0
      %706 = vmatprep.subr.mxu0 0.0
      %707 = vmatpush1.msra.mxu0 0.0
      %708 = vmatprep.subr.mxu0 0.0
      %709 = vmatpush1.msra.mxu0 0.0
      %710 = vmatprep.subr.mxu0 0.0
      %711 = vmatpush1.msra.mxu0 0.0
      %712 = vmatprep.subr.mxu0 0.0
      %713 = vmatpush1.msra.mxu0 0.0
      %714 = vmatprep.subr.mxu0 0.0
      %715 = vmatpush1.msra.mxu0 0.0
      %716 = vmatprep.mubr.f32.mxu0 0.0
      %717 = vmatmul.mubr.f32.gmra.mrb[0].mxu0 %v647
      %v718 = vpop.f32.mrb[0].mxu0
      %v719 = vadd.f32 %v638, %v718
      %v720 = vpop.f32.mrb[0].mxu0
      %v721 = vadd.f32 %v638, %v720
      %722 = vmatprep.mubr.f32.mxu0 0.0
      %723 = vmatmul.mubr.f32.gmra.mrb[0].mxu0 %v650
      %v724 = vpop.f32.mrb[0].mxu0
      %v725 = vadd.f32 %v643, %v724
      %v726 = vpop.f32.mrb[0].mxu0
      %v727 = vadd.f32 %v643, %v726
      %728 = vdwg.mxu0
      %729 = vmatprep.subr.mxu0 %v584
      %730 = vmatpush1.msra.mxu0 %v583
      %731 = vmatprep.subr.mxu0 %v590
      %732 = vmatpush1.msra.mxu0 %v589
      %733 = vmatprep.subr.mxu0 %v596
      %734 = vmatpush1.msra.mxu0 %v595
      %735 = vmatprep.subr.mxu0 %v602
      %736 = vmatpush1.msra.mxu0 %v601
      %737 = vmatprep.subr.mxu0 %v608
      %738 = vmatpush1.msra.mxu0 %v607
      %739 = vmatprep.subr.mxu0 %v614
      %740 = vmatpush1.msra.mxu0 %v613
      %741 = vmatprep.subr.mxu0 %v620
      %742 = vmatpush1.msra.mxu0 %v619
      %743 = vmatprep.subr.mxu0 %v626
      %744 = vmatpush1.msra.mxu0 %v625
      %745 = vmatprep.subr.mxu0 %v632
      %746 = vmatpush1.msra.mxu0 %v631
      %747 = vmatprep.subr.mxu0 0.0
      %748 = vmatpush1.msra.mxu0 0.0
      %749 = vmatprep.subr.mxu0 0.0
      %750 = vmatpush1.msra.mxu0 0.0
      %751 = vmatprep.subr.mxu0 0.0
      %752 = vmatpush1.msra.mxu0 0.0
      %753 = vmatprep.subr.mxu0 0.0
      %754 = vmatpush1.msra.mxu0 0.0
      %755 = vmatprep.subr.mxu0 0.0
      %756 = vmatpush1.msra.mxu0 0.0
      %757 = vmatprep.subr.mxu0 0.0
      %758 = vmatpush1.msra.mxu0 0.0
      %759 = vmatprep.subr.mxu0 0.0
      %760 = vmatpush1.msra.mxu0 0.0
      %761 = vmatprep.subr.mxu0 0.0
      %762 = vmatpush1.msra.mxu0 0.0
      %763 = vmatprep.subr.mxu0 0.0
      %764 = vmatpush1.msra.mxu0 0.0
      %765 = vmatprep.subr.mxu0 0.0
      %766 = vmatpush1.msra.mxu0 0.0
      %767 = vmatprep.subr.mxu0 0.0
      %768 = vmatpush1.msra.mxu0 0.0
      %769 = vmatprep.subr.mxu0 0.0
      %770 = vmatpush1.msra.mxu0 0.0
      %771 = vmatprep.subr.mxu0 0.0
      %772 = vmatpush1.msra.mxu0 0.0
      %773 = vmatprep.subr.mxu0 0.0
      %774 = vmatpush1.msra.mxu0 0.0
      %775 = vmatprep.subr.mxu0 0.0
      %776 = vmatpush1.msra.mxu0 0.0
      %777 = vmatprep.subr.mxu0 0.0
      %778 = vmatpush1.msra.mxu0 0.0
      %779 = vmatprep.subr.mxu0 0.0
      %780 = vmatpush1.msra.mxu0 0.0
      %781 = vmatprep.subr.mxu0 0.0
      %782 = vmatpush1.msra.mxu0 0.0
      %783 = vmatprep.subr.mxu0 0.0
      %784 = vmatpush1.msra.mxu0 0.0
      %785 = vmatprep.subr.mxu0 0.0
      %786 = vmatpush1.msra.mxu0 0.0
      %787 = vmatprep.subr.mxu0 0.0
      %788 = vmatpush1.msra.mxu0 0.0
      %789 = vmatprep.subr.mxu0 0.0
      %790 = vmatpush1.msra.mxu0 0.0
      %791 = vmatprep.subr.mxu0 0.0
      %792 = vmatpush1.msra.mxu0 0.0
      %793 = vmatprep.mubr.f32.mxu0 0.0
      %794 = vmatmul.mubr.f32.gmra.mrb[0].mxu0 %v647
      %v795 = vpop.f32.mrb[0].mxu0
      %v796 = vadd.f32 %v638, %v795
      %v797 = vpop.f32.mrb[0].mxu0
      %v798 = vadd.f32 %v638, %v797
      %799 = vmatprep.mubr.f32.mxu0 0.0
      %800 = vmatmul.mubr.f32.gmra.mrb[0].mxu0 %v650
      %v801 = vpop.f32.mrb[0].mxu0
      %v802 = vadd.f32 %v643, %v801
      %v803 = vpop.f32.mrb[0].mxu0
      %v804 = vadd.f32 %v643, %v803
      %805 = vdwg.mxu0
      %806 = vmatprep.subr.mxu0 %v586
      %807 = vmatpush1.msra.mxu0 %v585
      %808 = vmatprep.subr.mxu0 %v592
      %809 = vmatpush1.msra.mxu0 %v591
      %810 = vmatprep.subr.mxu0 %v598
      %811 = vmatpush1.msra.mxu0 %v597
      %812 = vmatprep.subr.mxu0 %v604
      %813 = vmatpush1.msra.mxu0 %v603
      %814 = vmatprep.subr.mxu0 %v610
      %815 = vmatpush1.msra.mxu0 %v609
      %816 = vmatprep.subr.mxu0 %v616
      %817 = vmatpush1.msra.mxu0 %v615
      %818 = vmatprep.subr.mxu0 %v622
      %819 = vmatpush1.msra.mxu0 %v621
      %820 = vmatprep.subr.mxu0 %v628
      %821 = vmatpush1.msra.mxu0 %v627
      %822 = vmatprep.subr.mxu0 %v634
      %823 = vmatpush1.msra.mxu0 %v633
      %824 = vmatprep.subr.mxu0 0.0
      %825 = vmatpush1.msra.mxu0 0.0
      %826 = vmatprep.subr.mxu0 0.0
      %827 = vmatpush1.msra.mxu0 0.0
      %828 = vmatprep.subr.mxu0 0.0
      %829 = vmatpush1.msra.mxu0 0.0
      %830 = vmatprep.subr.mxu0 0.0
      %831 = vmatpush1.msra.mxu0 0.0
      %832 = vmatprep.subr.mxu0 0.0
      %833 = vmatpush1.msra.mxu0 0.0
      %834 = vmatprep.subr.mxu0 0.0
      %835 = vmatpush1.msra.mxu0 0.0
      %836 = vmatprep.subr.mxu0 0.0
      %837 = vmatpush1.msra.mxu0 0.0
      %838 = vmatprep.subr.mxu0 0.0
      %839 = vmatpush1.msra.mxu0 0.0
      %840 = vmatprep.subr.mxu0 0.0
      %841 = vmatpush1.msra.mxu0 0.0
      %842 = vmatprep.subr.mxu0 0.0
      %843 = vmatpush1.msra.mxu0 0.0
      %844 = vmatprep.subr.mxu0 0.0
      %845 = vmatpush1.msra.mxu0 0.0
      %846 = vmatprep.subr.mxu0 0.0
      %847 = vmatpush1.msra.mxu0 0.0
      %848 = vmatprep.subr.mxu0 0.0
      %849 = vmatpush1.msra.mxu0 0.0
      %850 = vmatprep.subr.mxu0 0.0
      %851 = vmatpush1.msra.mxu0 0.0
      %852 = vmatprep.subr.mxu0 0.0
      %853 = vmatpush1.msra.mxu0 0.0
      %854 = vmatprep.subr.mxu0 0.0
      %855 = vmatpush1.msra.mxu0 0.0
      %856 = vmatprep.subr.mxu0 0.0
      %857 = vmatpush1.msra.mxu0 0.0
      %858 = vmatprep.subr.mxu0 0.0
      %859 = vmatpush1.msra.mxu0 0.0
      %860 = vmatprep.subr.mxu0 0.0
      %861 = vmatpush1.msra.mxu0 0.0
      %862 = vmatprep.subr.mxu0 0.0
      %863 = vmatpush1.msra.mxu0 0.0
      %864 = vmatprep.subr.mxu0 0.0
      %865 = vmatpush1.msra.mxu0 0.0
      %866 = vmatprep.subr.mxu0 0.0
      %867 = vmatpush1.msra.mxu0 0.0
      %868 = vmatprep.subr.mxu0 0.0
      %869 = vmatpush1.msra.mxu0 0.0
      %870 = vmatprep.mubr.f32.mxu0 0.0
      %871 = vmatmul.mubr.f32.gmra.mrb[0].mxu0 %v647
      %v872 = vpop.f32.mrb[0].mxu0
      %v873 = vadd.f32 %v638, %v872
      %v874 = vpop.f32.mrb[0].mxu0
      %v875 = vadd.f32 %v638, %v874
      %876 = vmatprep.mubr.f32.mxu0 0.0
      %877 = vmatmul.mubr.f32.gmra.mrb[0].mxu0 %v650
      %v878 = vpop.f32.mrb[0].mxu0
      %v879 = vadd.f32 %v643, %v878
      %v880 = vpop.f32.mrb[0].mxu0
      %v881 = vadd.f32 %v643, %v880
      %882 = vdwg.mxu0
      %s883 = scalar_lea.vmem %s6, %s180
      %v884 = vld [vmem:[%s883] sm:$0xff]
      %v885 = vld [vmem:[%s883 + $0x8] sm:$0xff]
      %s886 = scalar_lea.vmem %s7, %s180
      %v887 = vld [vmem:[%s886] sm:$0xff]
      %v888 = vld [vmem:[%s886 + $0x8] sm:$0xff]
      %v889 = vmul.f32 %v719, %v45
      %v890 = vmul.f32 %v721, %v49
      %v891 = vmul.f32 %v796, %v53
      %v892 = vmul.f32 %v798, %v57
      %v893 = vmul.f32 %v873, %v61
      %v894 = vmul.f32 %v875, %v65
      %v895 = vmul.f32 %v725, %v45
      %v896 = vmul.f32 %v727, %v49
      %v897 = vmul.f32 %v802, %v53
      %v898 = vmul.f32 %v804, %v57
      %v899 = vmul.f32 %v879, %v61
      %v900 = vmul.f32 %v881, %v65
      %v901 = vadd.f32 %v889, %v890
      %v902 = vadd.f32 %v901, %v891
      %v903 = vadd.f32 %v902, %v892
      %v904 = vadd.f32 %v903, %v893
      %v905 = vadd.f32 %v904, %v894
      %906 = vadd.xlane.f32.xlu0 %v905
      %v907 = vpop.xlane.xlu0 %906
      %v908 = vadd.f32 %v895, %v896
      %v909 = vadd.f32 %v908, %v897
      %v910 = vadd.f32 %v909, %v898
      %v911 = vadd.f32 %v910, %v899
      %v912 = vadd.f32 %v911, %v900
      %913 = vadd.xlane.f32.xlu0 %v912
      %v914 = vpop.xlane.xlu0 %913
      %v915 = vmul.f32 %v889, %v719
      %v916 = vmul.f32 %v890, %v721
      %v917 = vmul.f32 %v891, %v796
      %v918 = vmul.f32 %v892, %v798
      %v919 = vmul.f32 %v893, %v873
      %v920 = vmul.f32 %v894, %v875
      %v921 = vmul.f32 %v895, %v725
      %v922 = vmul.f32 %v896, %v727
      %v923 = vmul.f32 %v897, %v802
      %v924 = vmul.f32 %v898, %v804
      %v925 = vmul.f32 %v899, %v879
      %v926 = vmul.f32 %v900, %v881
      %v927 = vadd.f32 %v915, %v916
      %v928 = vadd.f32 %v927, %v917
      %v929 = vadd.f32 %v928, %v918
      %v930 = vadd.f32 %v929, %v919
      %v931 = vadd.f32 %v930, %v920
      %932 = vadd.xlane.f32.xlu0 %v931
      %v933 = vpop.xlane.xlu0 %932
      %v934 = vadd.f32 %v921, %v922
      %v935 = vadd.f32 %v934, %v923
      %v936 = vadd.f32 %v935, %v924
      %v937 = vadd.f32 %v936, %v925
      %v938 = vadd.f32 %v937, %v926
      %939 = vadd.xlane.f32.xlu0 %v938
      %v940 = vpop.xlane.xlu0 %939
      %v941 = vmul.f32 %v907, 0.001953125
      %v942 = vmul.f32 %v914, 0.001953125
      %v943 = vmul.f32 %v933, 0.001953125
      %v944 = vmul.f32 %v940, 0.001953125
      %v945 = vmul.f32 %v941, %v941
      %v946 = vmul.f32 %v942, %v942
      %v947 = vsub.f32 %v943, %v945
      %v948 = vsub.f32 %v944, %v946
      %v949 = vsub.f32 %v719, %v941
      %v950 = vsub.f32 %v721, %v941
      %v951 = vsub.f32 %v796, %v941
      %v952 = vsub.f32 %v798, %v941
      %v953 = vsub.f32 %v873, %v941
      %v954 = vsub.f32 %v875, %v941
      %v955 = vsub.f32 %v725, %v942
      %v956 = vsub.f32 %v727, %v942
      %v957 = vsub.f32 %v802, %v942
      %v958 = vsub.f32 %v804, %v942
      %v959 = vsub.f32 %v879, %v942
      %v960 = vsub.f32 %v881, %v942
      %v961 = vadd.f32 %v947, 1e-05
      %v962 = vadd.f32 %v948, 1e-05
      %v963 = vrsqrt.pop %v961
      %v964 = vrsqrt.pop %v962
      %v965 = vmul.f32 %v884, %v963
      %v966 = vmul.f32 %v885, %v964
      %968 = vset.pattern.permute.xlu0 0
      %969 = vperm.xlu0 %968, %v965
      %v970 = vpop.permute.xlu0 %969
      %973 = vset.pattern.permute.xlu0 0
      %974 = vperm.xlu0 %973, %v966
      %v975 = vpop.permute.xlu0 %974
      %v977 = vmul.f32 %v949, %v970
      %v978 = vmul.f32 %v950, %v970
      %v979 = vmul.f32 %v951, %v970
      %v980 = vmul.f32 %v952, %v970
      %v981 = vmul.f32 %v953, %v970
      %v982 = vmul.f32 %v954, %v970
      %v983 = vmul.f32 %v955, %v975
      %v984 = vmul.f32 %v956, %v975
      %v985 = vmul.f32 %v957, %v975
      %v986 = vmul.f32 %v958, %v975
      %v987 = vmul.f32 %v959, %v975
      %v988 = vmul.f32 %v960, %v975
      %990 = vset.pattern.permute.xlu0 0
      %991 = vperm.xlu0 %990, %v887
      %v992 = vpop.permute.xlu0 %991
      %995 = vset.pattern.permute.xlu0 0
      %996 = vperm.xlu0 %995, %v888
      %v997 = vpop.permute.xlu0 %996
      %v999 = vadd.f32 %v977, %v992
      %v1000 = vadd.f32 %v978, %v992
      %v1001 = vadd.f32 %v979, %v992
      %v1002 = vadd.f32 %v980, %v992
      %v1003 = vadd.f32 %v981, %v992
      %v1004 = vadd.f32 %v982, %v992
      %v1005 = vadd.f32 %v983, %v997
      %v1006 = vadd.f32 %v984, %v997
      %v1007 = vadd.f32 %v985, %v997
      %v1008 = vadd.f32 %v986, %v997
      %v1009 = vadd.f32 %v987, %v997
      %v1010 = vadd.f32 %v988, %v997
      %vm1011 = vcmp.ge.f32.partialorder %v999, 0.0
      %vm1012 = vcmp.ge.f32.partialorder %v1000, 0.0
      %vm1013 = vcmp.ge.f32.partialorder %v1001, 0.0
      %vm1014 = vcmp.ge.f32.partialorder %v1002, 0.0
      %vm1015 = vcmp.ge.f32.partialorder %v1003, 0.0
      %vm1016 = vcmp.ge.f32.partialorder %v1004, 0.0
      %vm1017 = vcmp.ge.f32.partialorder %v1005, 0.0
      %vm1018 = vcmp.ge.f32.partialorder %v1006, 0.0
      %vm1019 = vcmp.ge.f32.partialorder %v1007, 0.0
      %vm1020 = vcmp.ge.f32.partialorder %v1008, 0.0
      %vm1021 = vcmp.ge.f32.partialorder %v1009, 0.0
      %vm1022 = vcmp.ge.f32.partialorder %v1010, 0.0
      %v1023 = vmul.f32 %v999, 0.01
      %v1024 = vmul.f32 %v1000, 0.01
      %v1025 = vmul.f32 %v1001, 0.01
      %v1026 = vmul.f32 %v1002, 0.01
      %v1027 = vmul.f32 %v1003, 0.01
      %v1028 = vmul.f32 %v1004, 0.01
      %v1029 = vmul.f32 %v1005, 0.01
      %v1030 = vmul.f32 %v1006, 0.01
      %v1031 = vmul.f32 %v1007, 0.01
      %v1032 = vmul.f32 %v1008, 0.01
      %v1033 = vmul.f32 %v1009, 0.01
      %v1034 = vmul.f32 %v1010, 0.01
      %v1035 = vsel %vm1011, %v999, %v1023
      %v1036 = vsel %vm1012, %v1000, %v1024
      %v1037 = vsel %vm1013, %v1001, %v1025
      %v1038 = vsel %vm1014, %v1002, %v1026
      %v1039 = vsel %vm1015, %v1003, %v1027
      %v1040 = vsel %vm1016, %v1004, %v1028
      %v1041 = vsel %vm1017, %v1005, %v1029
      %v1042 = vsel %vm1018, %v1006, %v1030
      %v1043 = vsel %vm1019, %v1007, %v1031
      %v1044 = vsel %vm1020, %v1008, %v1032
      %v1045 = vsel %vm1021, %v1009, %v1033
      %v1046 = vsel %vm1022, %v1010, %v1034
      %v1047 = vmul.f32 %v1035, %v45
      %v1048 = vmul.f32 %v1036, %v49
      %v1049 = vmul.f32 %v1037, %v53
      %v1050 = vmul.f32 %v1038, %v57
      %v1051 = vmul.f32 %v1039, %v61
      %v1052 = vmul.f32 %v1040, %v65
      %v1053 = vmul.f32 %v1041, %v45
      %v1054 = vmul.f32 %v1042, %v49
      %v1055 = vmul.f32 %v1043, %v53
      %v1056 = vmul.f32 %v1044, %v57
      %v1057 = vmul.f32 %v1045, %v61
      %v1058 = vmul.f32 %v1046, %v65
      %s1059 = smul.u32 %s79, 2
      %s1060 = smul.addr %s1059, 8
      %s1061 = scalar_lea.vmem %s8, %s1060
      %v1062 = vld [vmem:[%s1061] sm:$0xff]
      %v1063 = vld [vmem:[%s1061 + $0x8] sm:$0xff]
      %s1064 = scalar_lea.vmem %s9, %s90
      %v1065 = vld [vmem:[%s1064] sm:$0xff]
      %1066 = vst [vmem:[#allocation2 + $0x8] sm:$0xff] %v1047
      %1067 = vst [vmem:[#allocation2 + $0x10] sm:$0xff] %v1048
      %1068 = vst [vmem:[#allocation2 + $0x18] sm:$0xff] %v1049
      %1069 = vst [vmem:[#allocation2 + $0x20] sm:$0xff] %v1050
      %1070 = vst [vmem:[#allocation2 + $0x28] sm:$0xff] %v1051
      %1071 = vst [vmem:[#allocation2 + $0x30] sm:$0xff] %v1052
      %1072 = vst [vmem:[#allocation2 + $0x48] sm:$0xff] %v1053
      %1073 = vst [vmem:[#allocation2 + $0x50] sm:$0xff] %v1054
      %1074 = vst [vmem:[#allocation2 + $0x58] sm:$0xff] %v1055
      %1075 = vst [vmem:[#allocation2 + $0x60] sm:$0xff] %v1056
      %1076 = vst [vmem:[#allocation2 + $0x68] sm:$0xff] %v1057
      %1077 = vst [vmem:[#allocation2 + $0x70] sm:$0xff] %v1058
      %v1078 = vld [vmem:[#allocation2] sm:$0xff]
      %v1079 = vld [vmem:[#allocation2 + $0x8] sm:$0xff]
      %v1080 = vld [vmem:[#allocation2 + $0x10] sm:$0xff]
      %v1081 = vld [vmem:[#allocation2 + $0x18] sm:$0xff]
      %v1082 = vld [vmem:[#allocation2 + $0x20] sm:$0xff]
      %v1083 = vld [vmem:[#allocation2 + $0x28] sm:$0xff]
      %v1084 = vld [vmem:[#allocation2 + $0x30] sm:$0xff]
      %v1085 = vld [vmem:[#allocation2 + $0x40] sm:$0xff]
      %v1086 = vld [vmem:[#allocation2 + $0x48] sm:$0xff]
      %v1087 = vld [vmem:[#allocation2 + $0x50] sm:$0xff]
      %v1088 = vld [vmem:[#allocation2 + $0x58] sm:$0xff]
      %v1089 = vld [vmem:[#allocation2 + $0x60] sm:$0xff]
      %v1090 = vld [vmem:[#allocation2 + $0x68] sm:$0xff]
      %v1091 = vld [vmem:[#allocation2 + $0x70] sm:$0xff]
      %1106 = vrot.lane.b32.xlu0 %v1078, 19
      %v1107 = vpop.permute.xlu0 %1106
      %1108 = vrot.lane.b32.xlu0 %v1079, 19
      %v1109 = vpop.permute.xlu0 %1108
      %1110 = vrot.lane.b32.xlu0 %v1080, 19
      %v1111 = vpop.permute.xlu0 %1110
      %1112 = vrot.lane.b32.xlu0 %v1081, 19
      %v1113 = vpop.permute.xlu0 %1112
      %1114 = vrot.lane.b32.xlu0 %v1082, 19
      %v1115 = vpop.permute.xlu0 %1114
      %1116 = vrot.lane.b32.xlu0 %v1083, 19
      %v1117 = vpop.permute.xlu0 %1116
      %1118 = vrot.lane.b32.xlu0 %v1084, 19
      %v1119 = vpop.permute.xlu0 %1118
      %1120 = vrot.lane.b32.xlu0 %v1085, 19
      %v1121 = vpop.permute.xlu0 %1120
      %1122 = vrot.lane.b32.xlu0 %v1086, 19
      %v1123 = vpop.permute.xlu0 %1122
      %1124 = vrot.lane.b32.xlu0 %v1087, 19
      %v1125 = vpop.permute.xlu0 %1124
      %1126 = vrot.lane.b32.xlu0 %v1088, 19
      %v1127 = vpop.permute.xlu0 %1126
      %1128 = vrot.lane.b32.xlu0 %v1089, 19
      %v1129 = vpop.permute.xlu0 %1128
      %1130 = vrot.lane.b32.xlu0 %v1090, 19
      %v1131 = vpop.permute.xlu0 %1130
      %1132 = vrot.lane.b32.xlu0 %v1091, 19
      %v1133 = vpop.permute.xlu0 %1132
      %v1134 = vsel %vm221, %v1107, %v1109
      %v1135 = vsel %vm221, %v1109, %v1111
      %v1136 = vsel %vm221, %v1111, %v1113
      %v1137 = vsel %vm221, %v1113, %v1115
      %v1138 = vsel %vm221, %v1115, %v1117
      %v1139 = vsel %vm221, %v1117, %v1119
      %v1140 = vsel %vm221, %v1121, %v1123
      %v1141 = vsel %vm221, %v1123, %v1125
      %v1142 = vsel %vm221, %v1125, %v1127
      %v1143 = vsel %vm221, %v1127, %v1129
      %v1144 = vsel %vm221, %v1129, %v1131
      %v1145 = vsel %vm221, %v1131, %v1133
      %1158 = vst [vmem:[#allocation3] sm:$0xff] %v1134
      %1159 = vst [vmem:[#allocation3 + $0x8] sm:$0xff] %v1135
      %1160 = vst [vmem:[#allocation3 + $0x10] sm:$0xff] %v1136
      %1161 = vst [vmem:[#allocation3 + $0x18] sm:$0xff] %v1137
      %1162 = vst [vmem:[#allocation3 + $0x20] sm:$0xff] %v1138
      %1163 = vst [vmem:[#allocation3 + $0x28] sm:$0xff] %v1139
      %1164 = vst [vmem:[#allocation3 + $0x30] sm:$0xff] %v1140
      %1165 = vst [vmem:[#allocation3 + $0x38] sm:$0xff] %v1141
      %1166 = vst [vmem:[#allocation3 + $0x40] sm:$0xff] %v1142
      %1167 = vst [vmem:[#allocation3 + $0x48] sm:$0xff] %v1143
      %1168 = vst [vmem:[#allocation3 + $0x50] sm:$0xff] %v1144
      %1169 = vst [vmem:[#allocation3 + $0x58] sm:$0xff] %v1145
      %v1170 = vld [vmem:[#allocation2] sm:$0xff]
      %v1171 = vld [vmem:[#allocation2 + $0x8] sm:$0xff]
      %v1172 = vld [vmem:[#allocation2 + $0x10] sm:$0xff]
      %v1173 = vld [vmem:[#allocation2 + $0x18] sm:$0xff]
      %v1174 = vld [vmem:[#allocation2 + $0x20] sm:$0xff]
      %v1175 = vld [vmem:[#allocation2 + $0x28] sm:$0xff]
      %v1176 = vld [vmem:[#allocation2 + $0x30] sm:$0xff]
      %v1177 = vld [vmem:[#allocation2 + $0x40] sm:$0xff]
      %v1178 = vld [vmem:[#allocation2 + $0x48] sm:$0xff]
      %v1179 = vld [vmem:[#allocation2 + $0x50] sm:$0xff]
      %v1180 = vld [vmem:[#allocation2 + $0x58] sm:$0xff]
      %v1181 = vld [vmem:[#allocation2 + $0x60] sm:$0xff]
      %v1182 = vld [vmem:[#allocation2 + $0x68] sm:$0xff]
      %v1183 = vld [vmem:[#allocation2 + $0x70] sm:$0xff]
      %1198 = vrot.lane.b32.xlu0 %v1170, 18
      %v1199 = vpop.permute.xlu0 %1198
      %1200 = vrot.lane.b32.xlu0 %v1171, 18
      %v1201 = vpop.permute.xlu0 %1200
      %1202 = vrot.lane.b32.xlu0 %v1172, 18
      %v1203 = vpop.permute.xlu0 %1202
      %1204 = vrot.lane.b32.xlu0 %v1173, 18
      %v1205 = vpop.permute.xlu0 %1204
      %1206 = vrot.lane.b32.xlu0 %v1174, 18
      %v1207 = vpop.permute.xlu0 %1206
      %1208 = vrot.lane.b32.xlu0 %v1175, 18
      %v1209 = vpop.permute.xlu0 %1208
      %1210 = vrot.lane.b32.xlu0 %v1176, 18
      %v1211 = vpop.permute.xlu0 %1210
      %1212 = vrot.lane.b32.xlu0 %v1177, 18
      %v1213 = vpop.permute.xlu0 %1212
      %1214 = vrot.lane.b32.xlu0 %v1178, 18
      %v1215 = vpop.permute.xlu0 %1214
      %1216 = vrot.lane.b32.xlu0 %v1179, 18
      %v1217 = vpop.permute.xlu0 %1216
      %1218 = vrot.lane.b32.xlu0 %v1180, 18
      %v1219 = vpop.permute.xlu0 %1218
      %1220 = vrot.lane.b32.xlu0 %v1181, 18
      %v1221 = vpop.permute.xlu0 %1220
      %1222 = vrot.lane.b32.xlu0 %v1182, 18
      %v1223 = vpop.permute.xlu0 %1222
      %1224 = vrot.lane.b32.xlu0 %v1183, 18
      %v1225 = vpop.permute.xlu0 %1224
      %v1226 = vsel %vm268, %v1199, %v1201
      %v1227 = vsel %vm268, %v1201, %v1203
      %v1228 = vsel %vm268, %v1203, %v1205
      %v1229 = vsel %vm268, %v1205, %v1207
      %v1230 = vsel %vm268, %v1207, %v1209
      %v1231 = vsel %vm268, %v1209, %v1211
      %v1232 = vsel %vm268, %v1213, %v1215
      %v1233 = vsel %vm268, %v1215, %v1217
      %v1234 = vsel %vm268, %v1217, %v1219
      %v1235 = vsel %vm268, %v1219, %v1221
      %v1236 = vsel %vm268, %v1221, %v1223
      %v1237 = vsel %vm268, %v1223, %v1225
      %1250 = vst [vmem:[#allocation3 + $0x60] sm:$0xff] %v1226
      %1251 = vst [vmem:[#allocation3 + $0x68] sm:$0xff] %v1227
      %1252 = vst [vmem:[#allocation3 + $0x70] sm:$0xff] %v1228
      %1253 = vst [vmem:[#allocation3 + $0x78] sm:$0xff] %v1229
      %1254 = vst [vmem:[#allocation3 + $0x80] sm:$0xff] %v1230
      %1255 = vst [vmem:[#allocation3 + $0x88] sm:$0xff] %v1231
      %1256 = vst [vmem:[#allocation3 + $0x90] sm:$0xff] %v1232
      %1257 = vst [vmem:[#allocation3 + $0x98] sm:$0xff] %v1233
      %1258 = vst [vmem:[#allocation3 + $0xa0] sm:$0xff] %v1234
      %1259 = vst [vmem:[#allocation3 + $0xa8] sm:$0xff] %v1235
      %1260 = vst [vmem:[#allocation3 + $0xb0] sm:$0xff] %v1236
      %1261 = vst [vmem:[#allocation3 + $0xb8] sm:$0xff] %v1237
      %v1262 = vld [vmem:[#allocation2] sm:$0xff]
      %v1263 = vld [vmem:[#allocation2 + $0x8] sm:$0xff]
      %v1264 = vld [vmem:[#allocation2 + $0x10] sm:$0xff]
      %v1265 = vld [vmem:[#allocation2 + $0x18] sm:$0xff]
      %v1266 = vld [vmem:[#allocation2 + $0x20] sm:$0xff]
      %v1267 = vld [vmem:[#allocation2 + $0x28] sm:$0xff]
      %v1268 = vld [vmem:[#allocation2 + $0x30] sm:$0xff]
      %v1269 = vld [vmem:[#allocation2 + $0x40] sm:$0xff]
      %v1270 = vld [vmem:[#allocation2 + $0x48] sm:$0xff]
      %v1271 = vld [vmem:[#allocation2 + $0x50] sm:$0xff]
      %v1272 = vld [vmem:[#allocation2 + $0x58] sm:$0xff]
      %v1273 = vld [vmem:[#allocation2 + $0x60] sm:$0xff]
      %v1274 = vld [vmem:[#allocation2 + $0x68] sm:$0xff]
      %v1275 = vld [vmem:[#allocation2 + $0x70] sm:$0xff]
      %1290 = vrot.lane.b32.xlu0 %v1262, 17
      %v1291 = vpop.permute.xlu0 %1290
      %1292 = vrot.lane.b32.xlu0 %v1263, 17
      %v1293 = vpop.permute.xlu0 %1292
      %1294 = vrot.lane.b32.xlu0 %v1264, 17
      %v1295 = vpop.permute.xlu0 %1294
      %1296 = vrot.lane.b32.xlu0 %v1265, 17
      %v1297 = vpop.permute.xlu0 %1296
      %1298 = vrot.lane.b32.xlu0 %v1266, 17
      %v1299 = vpop.permute.xlu0 %1298
      %1300 = vrot.lane.b32.xlu0 %v1267, 17
      %v1301 = vpop.permute.xlu0 %1300
      %1302 = vrot.lane.b32.xlu0 %v1268, 17
      %v1303 = vpop.permute.xlu0 %1302
      %1304 = vrot.lane.b32.xlu0 %v1269, 17
      %v1305 = vpop.permute.xlu0 %1304
      %1306 = vrot.lane.b32.xlu0 %v1270, 17
      %v1307 = vpop.permute.xlu0 %1306
      %1308 = vrot.lane.b32.xlu0 %v1271, 17
      %v1309 = vpop.permute.xlu0 %1308
      %1310 = vrot.lane.b32.xlu0 %v1272, 17
      %v1311 = vpop.permute.xlu0 %1310
      %1312 = vrot.lane.b32.xlu0 %v1273, 17
      %v1313 = vpop.permute.xlu0 %1312
      %1314 = vrot.lane.b32.xlu0 %v1274, 17
      %v1315 = vpop.permute.xlu0 %1314
      %1316 = vrot.lane.b32.xlu0 %v1275, 17
      %v1317 = vpop.permute.xlu0 %1316
      %v1318 = vsel %vm315, %v1291, %v1293
      %v1319 = vsel %vm315, %v1293, %v1295
      %v1320 = vsel %vm315, %v1295, %v1297
      %v1321 = vsel %vm315, %v1297, %v1299
      %v1322 = vsel %vm315, %v1299, %v1301
      %v1323 = vsel %vm315, %v1301, %v1303
      %v1324 = vsel %vm315, %v1305, %v1307
      %v1325 = vsel %vm315, %v1307, %v1309
      %v1326 = vsel %vm315, %v1309, %v1311
      %v1327 = vsel %vm315, %v1311, %v1313
      %v1328 = vsel %vm315, %v1313, %v1315
      %v1329 = vsel %vm315, %v1315, %v1317
      %1342 = vst [vmem:[#allocation3 + $0xc0] sm:$0xff] %v1318
      %1343 = vst [vmem:[#allocation3 + $0xc8] sm:$0xff] %v1319
      %1344 = vst [vmem:[#allocation3 + $0xd0] sm:$0xff] %v1320
      %1345 = vst [vmem:[#allocation3 + $0xd8] sm:$0xff] %v1321
      %1346 = vst [vmem:[#allocation3 + $0xe0] sm:$0xff] %v1322
      %1347 = vst [vmem:[#allocation3 + $0xe8] sm:$0xff] %v1323
      %1348 = vst [vmem:[#allocation3 + $0xf0] sm:$0xff] %v1324
      %1349 = vst [vmem:[#allocation3 + $0xf8] sm:$0xff] %v1325
      %1350 = vst [vmem:[#allocation3 + $0x100] sm:$0xff] %v1326
      %1351 = vst [vmem:[#allocation3 + $0x108] sm:$0xff] %v1327
      %1352 = vst [vmem:[#allocation3 + $0x110] sm:$0xff] %v1328
      %1353 = vst [vmem:[#allocation3 + $0x118] sm:$0xff] %v1329
      %v1354 = vld [vmem:[#allocation2] sm:$0xff]
      %v1355 = vld [vmem:[#allocation2 + $0x8] sm:$0xff]
      %v1356 = vld [vmem:[#allocation2 + $0x10] sm:$0xff]
      %v1357 = vld [vmem:[#allocation2 + $0x18] sm:$0xff]
      %v1358 = vld [vmem:[#allocation2 + $0x20] sm:$0xff]
      %v1359 = vld [vmem:[#allocation2 + $0x28] sm:$0xff]
      %v1360 = vld [vmem:[#allocation2 + $0x30] sm:$0xff]
      %v1361 = vld [vmem:[#allocation2 + $0x40] sm:$0xff]
      %v1362 = vld [vmem:[#allocation2 + $0x48] sm:$0xff]
      %v1363 = vld [vmem:[#allocation2 + $0x50] sm:$0xff]
      %v1364 = vld [vmem:[#allocation2 + $0x58] sm:$0xff]
      %v1365 = vld [vmem:[#allocation2 + $0x60] sm:$0xff]
      %v1366 = vld [vmem:[#allocation2 + $0x68] sm:$0xff]
      %v1367 = vld [vmem:[#allocation2 + $0x70] sm:$0xff]
      %1382 = vrot.lane.b32.xlu0 %v1354, 1
      %v1383 = vpop.permute.xlu0 %1382
      %1384 = vrot.lane.b32.xlu0 %v1355, 1
      %v1385 = vpop.permute.xlu0 %1384
      %1386 = vrot.lane.b32.xlu0 %v1356, 1
      %v1387 = vpop.permute.xlu0 %1386
      %1388 = vrot.lane.b32.xlu0 %v1357, 1
      %v1389 = vpop.permute.xlu0 %1388
      %1390 = vrot.lane.b32.xlu0 %v1358, 1
      %v1391 = vpop.permute.xlu0 %1390
      %1392 = vrot.lane.b32.xlu0 %v1359, 1
      %v1393 = vpop.permute.xlu0 %1392
      %1394 = vrot.lane.b32.xlu0 %v1360, 1
      %v1395 = vpop.permute.xlu0 %1394
      %1396 = vrot.lane.b32.xlu0 %v1361, 1
      %v1397 = vpop.permute.xlu0 %1396
      %1398 = vrot.lane.b32.xlu0 %v1362, 1
      %v1399 = vpop.permute.xlu0 %1398
      %1400 = vrot.lane.b32.xlu0 %v1363, 1
      %v1401 = vpop.permute.xlu0 %1400
      %1402 = vrot.lane.b32.xlu0 %v1364, 1
      %v1403 = vpop.permute.xlu0 %1402
      %1404 = vrot.lane.b32.xlu0 %v1365, 1
      %v1405 = vpop.permute.xlu0 %1404
      %1406 = vrot.lane.b32.xlu0 %v1366, 1
      %v1407 = vpop.permute.xlu0 %1406
      %1408 = vrot.lane.b32.xlu0 %v1367, 1
      %v1409 = vpop.permute.xlu0 %1408
      %v1410 = vsel %vm362, %v1383, %v1385
      %v1411 = vsel %vm362, %v1385, %v1387
      %v1412 = vsel %vm362, %v1387, %v1389
      %v1413 = vsel %vm362, %v1389, %v1391
      %v1414 = vsel %vm362, %v1391, %v1393
      %v1415 = vsel %vm362, %v1393, %v1395
      %v1416 = vsel %vm362, %v1397, %v1399
      %v1417 = vsel %vm362, %v1399, %v1401
      %v1418 = vsel %vm362, %v1401, %v1403
      %v1419 = vsel %vm362, %v1403, %v1405
      %v1420 = vsel %vm362, %v1405, %v1407
      %v1421 = vsel %vm362, %v1407, %v1409
      %1434 = vst [vmem:[#allocation3 + $0x120] sm:$0xff] %v1410
      %1435 = vst [vmem:[#allocation3 + $0x128] sm:$0xff] %v1411
      %1436 = vst [vmem:[#allocation3 + $0x130] sm:$0xff] %v1412
      %1437 = vst [vmem:[#allocation3 + $0x138] sm:$0xff] %v1413
      %1438 = vst [vmem:[#allocation3 + $0x140] sm:$0xff] %v1414
      %1439 = vst [vmem:[#allocation3 + $0x148] sm:$0xff] %v1415
      %1440 = vst [vmem:[#allocation3 + $0x150] sm:$0xff] %v1416
      %1441 = vst [vmem:[#allocation3 + $0x158] sm:$0xff] %v1417
      %1442 = vst [vmem:[#allocation3 + $0x160] sm:$0xff] %v1418
      %1443 = vst [vmem:[#allocation3 + $0x168] sm:$0xff] %v1419
      %1444 = vst [vmem:[#allocation3 + $0x170] sm:$0xff] %v1420
      %1445 = vst [vmem:[#allocation3 + $0x178] sm:$0xff] %v1421
      %v1446 = vld [vmem:[#allocation2 + $0x8] sm:$0xff]
      %v1447 = vld [vmem:[#allocation2 + $0x10] sm:$0xff]
      %v1448 = vld [vmem:[#allocation2 + $0x18] sm:$0xff]
      %v1449 = vld [vmem:[#allocation2 + $0x20] sm:$0xff]
      %v1450 = vld [vmem:[#allocation2 + $0x28] sm:$0xff]
      %v1451 = vld [vmem:[#allocation2 + $0x30] sm:$0xff]
      %v1452 = vld [vmem:[#allocation2 + $0x48] sm:$0xff]
      %v1453 = vld [vmem:[#allocation2 + $0x50] sm:$0xff]
      %v1454 = vld [vmem:[#allocation2 + $0x58] sm:$0xff]
      %v1455 = vld [vmem:[#allocation2 + $0x60] sm:$0xff]
      %v1456 = vld [vmem:[#allocation2 + $0x68] sm:$0xff]
      %v1457 = vld [vmem:[#allocation2 + $0x70] sm:$0xff]
      %1458 = vst [vmem:[#allocation3 + $0x180] sm:$0xff] %v1446
      %1459 = vst [vmem:[#allocation3 + $0x188] sm:$0xff] %v1447
      %1460 = vst [vmem:[#allocation3 + $0x190] sm:$0xff] %v1448
      %1461 = vst [vmem:[#allocation3 + $0x198] sm:$0xff] %v1449
      %1462 = vst [vmem:[#allocation3 + $0x1a0] sm:$0xff] %v1450
      %1463 = vst [vmem:[#allocation3 + $0x1a8] sm:$0xff] %v1451
      %1464 = vst [vmem:[#allocation3 + $0x1b0] sm:$0xff] %v1452
      %1465 = vst [vmem:[#allocation3 + $0x1b8] sm:$0xff] %v1453
      %1466 = vst [vmem:[#allocation3 + $0x1c0] sm:$0xff] %v1454
      %1467 = vst [vmem:[#allocation3 + $0x1c8] sm:$0xff] %v1455
      %1468 = vst [vmem:[#allocation3 + $0x1d0] sm:$0xff] %v1456
      %1469 = vst [vmem:[#allocation3 + $0x1d8] sm:$0xff] %v1457
      %v1470 = vld [vmem:[#allocation2 + $0x8] sm:$0xff]
      %v1471 = vld [vmem:[#allocation2 + $0x10] sm:$0xff]
      %v1472 = vld [vmem:[#allocation2 + $0x18] sm:$0xff]
      %v1473 = vld [vmem:[#allocation2 + $0x20] sm:$0xff]
      %v1474 = vld [vmem:[#allocation2 + $0x28] sm:$0xff]
      %v1475 = vld [vmem:[#allocation2 + $0x30] sm:$0xff]
      %v1476 = vld [vmem:[#allocation2 + $0x38] sm:$0xff]
      %v1477 = vld [vmem:[#allocation2 + $0x48] sm:$0xff]
      %v1478 = vld [vmem:[#allocation2 + $0x50] sm:$0xff]
      %v1479 = vld [vmem:[#allocation2 + $0x58] sm:$0xff]
      %v1480 = vld [vmem:[#allocation2 + $0x60] sm:$0xff]
      %v1481 = vld [vmem:[#allocation2 + $0x68] sm:$0xff]
      %v1482 = vld [vmem:[#allocation2 + $0x70] sm:$0xff]
      %v1483 = vld [vmem:[#allocation2 + $0x78] sm:$0xff]
      %1498 = vrot.lane.b32.xlu0 %v1470, 127
      %v1499 = vpop.permute.xlu0 %1498
      %1500 = vrot.lane.b32.xlu0 %v1471, 127
      %v1501 = vpop.permute.xlu0 %1500
      %1502 = vrot.lane.b32.xlu0 %v1472, 127
      %v1503 = vpop.permute.xlu0 %1502
      %1504 = vrot.lane.b32.xlu0 %v1473, 127
      %v1505 = vpop.permute.xlu0 %1504
      %1506 = vrot.lane.b32.xlu0 %v1474, 127
      %v1507 = vpop.permute.xlu0 %1506
      %1508 = vrot.lane.b32.xlu0 %v1475, 127
      %v1509 = vpop.permute.xlu0 %1508
      %1510 = vrot.lane.b32.xlu0 %v1476, 127
      %v1511 = vpop.permute.xlu0 %1510
      %1512 = vrot.lane.b32.xlu0 %v1477, 127
      %v1513 = vpop.permute.xlu0 %1512
      %1514 = vrot.lane.b32.xlu0 %v1478, 127
      %v1515 = vpop.permute.xlu0 %1514
      %1516 = vrot.lane.b32.xlu0 %v1479, 127
      %v1517 = vpop.permute.xlu0 %1516
      %1518 = vrot.lane.b32.xlu0 %v1480, 127
      %v1519 = vpop.permute.xlu0 %1518
      %1520 = vrot.lane.b32.xlu0 %v1481, 127
      %v1521 = vpop.permute.xlu0 %1520
      %1522 = vrot.lane.b32.xlu0 %v1482, 127
      %v1523 = vpop.permute.xlu0 %1522
      %1524 = vrot.lane.b32.xlu0 %v1483, 127
      %v1525 = vpop.permute.xlu0 %1524
      %v1526 = vsel %vm421, %v1499, %v1501
      %v1527 = vsel %vm421, %v1501, %v1503
      %v1528 = vsel %vm421, %v1503, %v1505
      %v1529 = vsel %vm421, %v1505, %v1507
      %v1530 = vsel %vm421, %v1507, %v1509
      %v1531 = vsel %vm421, %v1509, %v1511
      %v1532 = vsel %vm421, %v1513, %v1515
      %v1533 = vsel %vm421, %v1515, %v1517
      %v1534 = vsel %vm421, %v1517, %v1519
      %v1535 = vsel %vm421, %v1519, %v1521
      %v1536 = vsel %vm421, %v1521, %v1523
      %v1537 = vsel %vm421, %v1523, %v1525
      %1550 = vst [vmem:[#allocation3 + $0x1e0] sm:$0xff] %v1526
      %1551 = vst [vmem:[#allocation3 + $0x1e8] sm:$0xff] %v1527
      %1552 = vst [vmem:[#allocation3 + $0x1f0] sm:$0xff] %v1528
      %1553 = vst [vmem:[#allocation3 + $0x1f8] sm:$0xff] %v1529
      %1554 = vst [vmem:[#allocation3 + $0x200] sm:$0xff] %v1530
      %1555 = vst [vmem:[#allocation3 + $0x208] sm:$0xff] %v1531
      %1556 = vst [vmem:[#allocation3 + $0x210] sm:$0xff] %v1532
      %1557 = vst [vmem:[#allocation3 + $0x218] sm:$0xff] %v1533
      %1558 = vst [vmem:[#allocation3 + $0x220] sm:$0xff] %v1534
      %1559 = vst [vmem:[#allocation3 + $0x228] sm:$0xff] %v1535
      %1560 = vst [vmem:[#allocation3 + $0x230] sm:$0xff] %v1536
      %1561 = vst [vmem:[#allocation3 + $0x238] sm:$0xff] %v1537
      %v1562 = vld [vmem:[#allocation2 + $0x8] sm:$0xff]
      %v1563 = vld [vmem:[#allocation2 + $0x10] sm:$0xff]
      %v1564 = vld [vmem:[#allocation2 + $0x18] sm:$0xff]
      %v1565 = vld [vmem:[#allocation2 + $0x20] sm:$0xff]
      %v1566 = vld [vmem:[#allocation2 + $0x28] sm:$0xff]
      %v1567 = vld [vmem:[#allocation2 + $0x30] sm:$0xff]
      %v1568 = vld [vmem:[#allocation2 + $0x38] sm:$0xff]
      %v1569 = vld [vmem:[#allocation2 + $0x48] sm:$0xff]
      %v1570 = vld [vmem:[#allocation2 + $0x50] sm:$0xff]
      %v1571 = vld [vmem:[#allocation2 + $0x58] sm:$0xff]
      %v1572 = vld [vmem:[#allocation2 + $0x60] sm:$0xff]
      %v1573 = vld [vmem:[#allocation2 + $0x68] sm:$0xff]
      %v1574 = vld [vmem:[#allocation2 + $0x70] sm:$0xff]
      %v1575 = vld [vmem:[#allocation2 + $0x78] sm:$0xff]
      %1590 = vrot.lane.b32.xlu0 %v1562, 111
      %v1591 = vpop.permute.xlu0 %1590
      %1592 = vrot.lane.b32.xlu0 %v1563, 111
      %v1593 = vpop.permute.xlu0 %1592
      %1594 = vrot.lane.b32.xlu0 %v1564, 111
      %v1595 = vpop.permute.xlu0 %1594
      %1596 = vrot.lane.b32.xlu0 %v1565, 111
      %v1597 = vpop.permute.xlu0 %1596
      %1598 = vrot.lane.b32.xlu0 %v1566, 111
      %v1599 = vpop.permute.xlu0 %1598
      %1600 = vrot.lane.b32.xlu0 %v1567, 111
      %v1601 = vpop.permute.xlu0 %1600
      %1602 = vrot.lane.b32.xlu0 %v1568, 111
      %v1603 = vpop.permute.xlu0 %1602
      %1604 = vrot.lane.b32.xlu0 %v1569, 111
      %v1605 = vpop.permute.xlu0 %1604
      %1606 = vrot.lane.b32.xlu0 %v1570, 111
      %v1607 = vpop.permute.xlu0 %1606
      %1608 = vrot.lane.b32.xlu0 %v1571, 111
      %v1609 = vpop.permute.xlu0 %1608
      %1610 = vrot.lane.b32.xlu0 %v1572, 111
      %v1611 = vpop.permute.xlu0 %1610
      %1612 = vrot.lane.b32.xlu0 %v1573, 111
      %v1613 = vpop.permute.xlu0 %1612
      %1614 = vrot.lane.b32.xlu0 %v1574, 111
      %v1615 = vpop.permute.xlu0 %1614
      %1616 = vrot.lane.b32.xlu0 %v1575, 111
      %v1617 = vpop.permute.xlu0 %1616
      %v1618 = vsel %vm468, %v1591, %v1593
      %v1619 = vsel %vm468, %v1593, %v1595
      %v1620 = vsel %vm468, %v1595, %v1597
      %v1621 = vsel %vm468, %v1597, %v1599
      %v1622 = vsel %vm468, %v1599, %v1601
      %v1623 = vsel %vm468, %v1601, %v1603
      %v1624 = vsel %vm468, %v1605, %v1607
      %v1625 = vsel %vm468, %v1607, %v1609
      %v1626 = vsel %vm468, %v1609, %v1611
      %v1627 = vsel %vm468, %v1611, %v1613
      %v1628 = vsel %vm468, %v1613, %v1615
      %v1629 = vsel %vm468, %v1615, %v1617
      %1642 = vst [vmem:[#allocation3 + $0x240] sm:$0xff] %v1618
      %1643 = vst [vmem:[#allocation3 + $0x248] sm:$0xff] %v1619
      %1644 = vst [vmem:[#allocation3 + $0x250] sm:$0xff] %v1620
      %1645 = vst [vmem:[#allocation3 + $0x258] sm:$0xff] %v1621
      %1646 = vst [vmem:[#allocation3 + $0x260] sm:$0xff] %v1622
      %1647 = vst [vmem:[#allocation3 + $0x268] sm:$0xff] %v1623
      %1648 = vst [vmem:[#allocation3 + $0x270] sm:$0xff] %v1624
      %1649 = vst [vmem:[#allocation3 + $0x278] sm:$0xff] %v1625
      %1650 = vst [vmem:[#allocation3 + $0x280] sm:$0xff] %v1626
      %1651 = vst [vmem:[#allocation3 + $0x288] sm:$0xff] %v1627
      %1652 = vst [vmem:[#allocation3 + $0x290] sm:$0xff] %v1628
      %1653 = vst [vmem:[#allocation3 + $0x298] sm:$0xff] %v1629
      %v1654 = vld [vmem:[#allocation2 + $0x8] sm:$0xff]
      %v1655 = vld [vmem:[#allocation2 + $0x10] sm:$0xff]
      %v1656 = vld [vmem:[#allocation2 + $0x18] sm:$0xff]
      %v1657 = vld [vmem:[#allocation2 + $0x20] sm:$0xff]
      %v1658 = vld [vmem:[#allocation2 + $0x28] sm:$0xff]
      %v1659 = vld [vmem:[#allocation2 + $0x30] sm:$0xff]
      %v1660 = vld [vmem:[#allocation2 + $0x38] sm:$0xff]
      %v1661 = vld [vmem:[#allocation2 + $0x48] sm:$0xff]
      %v1662 = vld [vmem:[#allocation2 + $0x50] sm:$0xff]
      %v1663 = vld [vmem:[#allocation2 + $0x58] sm:$0xff]
      %v1664 = vld [vmem:[#allocation2 + $0x60] sm:$0xff]
      %v1665 = vld [vmem:[#allocation2 + $0x68] sm:$0xff]
      %v1666 = vld [vmem:[#allocation2 + $0x70] sm:$0xff]
      %v1667 = vld [vmem:[#allocation2 + $0x78] sm:$0xff]
      %1682 = vrot.lane.b32.xlu0 %v1654, 110
      %v1683 = vpop.permute.xlu0 %1682
      %1684 = vrot.lane.b32.xlu0 %v1655, 110
      %v1685 = vpop.permute.xlu0 %1684
      %1686 = vrot.lane.b32.xlu0 %v1656, 110
      %v1687 = vpop.permute.xlu0 %1686
      %1688 = vrot.lane.b32.xlu0 %v1657, 110
      %v1689 = vpop.permute.xlu0 %1688
      %1690 = vrot.lane.b32.xlu0 %v1658, 110
      %v1691 = vpop.permute.xlu0 %1690
      %1692 = vrot.lane.b32.xlu0 %v1659, 110
      %v1693 = vpop.permute.xlu0 %1692
      %1694 = vrot.lane.b32.xlu0 %v1660, 110
      %v1695 = vpop.permute.xlu0 %1694
      %1696 = vrot.lane.b32.xlu0 %v1661, 110
      %v1697 = vpop.permute.xlu0 %1696
      %1698 = vrot.lane.b32.xlu0 %v1662, 110
      %v1699 = vpop.permute.xlu0 %1698
      %1700 = vrot.lane.b32.xlu0 %v1663, 110
      %v1701 = vpop.permute.xlu0 %1700
      %1702 = vrot.lane.b32.xlu0 %v1664, 110
      %v1703 = vpop.permute.xlu0 %1702
      %1704 = vrot.lane.b32.xlu0 %v1665, 110
      %v1705 = vpop.permute.xlu0 %1704
      %1706 = vrot.lane.b32.xlu0 %v1666, 110
      %v1707 = vpop.permute.xlu0 %1706
      %1708 = vrot.lane.b32.xlu0 %v1667, 110
      %v1709 = vpop.permute.xlu0 %1708
      %v1710 = vsel %vm515, %v1683, %v1685
      %v1711 = vsel %vm515, %v1685, %v1687
      %v1712 = vsel %vm515, %v1687, %v1689
      %v1713 = vsel %vm515, %v1689, %v1691
      %v1714 = vsel %vm515, %v1691, %v1693
      %v1715 = vsel %vm515, %v1693, %v1695
      %v1716 = vsel %vm515, %v1697, %v1699
      %v1717 = vsel %vm515, %v1699, %v1701
      %v1718 = vsel %vm515, %v1701, %v1703
      %v1719 = vsel %vm515, %v1703, %v1705
      %v1720 = vsel %vm515, %v1705, %v1707
      %v1721 = vsel %vm515, %v1707, %v1709
      %1734 = vst [vmem:[#allocation3 + $0x2a0] sm:$0xff] %v1710
      %1735 = vst [vmem:[#allocation3 + $0x2a8] sm:$0xff] %v1711
      %1736 = vst [vmem:[#allocation3 + $0x2b0] sm:$0xff] %v1712
      %1737 = vst [vmem:[#allocation3 + $0x2b8] sm:$0xff] %v1713
      %1738 = vst [vmem:[#allocation3 + $0x2c0] sm:$0xff] %v1714
      %1739 = vst [vmem:[#allocation3 + $0x2c8] sm:$0xff] %v1715
      %1740 = vst [vmem:[#allocation3 + $0x2d0] sm:$0xff] %v1716
      %1741 = vst [vmem:[#allocation3 + $0x2d8] sm:$0xff] %v1717
      %1742 = vst [vmem:[#allocation3 + $0x2e0] sm:$0xff] %v1718
      %1743 = vst [vmem:[#allocation3 + $0x2e8] sm:$0xff] %v1719
      %1744 = vst [vmem:[#allocation3 + $0x2f0] sm:$0xff] %v1720
      %1745 = vst [vmem:[#allocation3 + $0x2f8] sm:$0xff] %v1721
      %v1746 = vld [vmem:[#allocation2 + $0x8] sm:$0xff]
      %v1747 = vld [vmem:[#allocation2 + $0x10] sm:$0xff]
      %v1748 = vld [vmem:[#allocation2 + $0x18] sm:$0xff]
      %v1749 = vld [vmem:[#allocation2 + $0x20] sm:$0xff]
      %v1750 = vld [vmem:[#allocation2 + $0x28] sm:$0xff]
      %v1751 = vld [vmem:[#allocation2 + $0x30] sm:$0xff]
      %v1752 = vld [vmem:[#allocation2 + $0x38] sm:$0xff]
      %v1753 = vld [vmem:[#allocation2 + $0x48] sm:$0xff]
      %v1754 = vld [vmem:[#allocation2 + $0x50] sm:$0xff]
      %v1755 = vld [vmem:[#allocation2 + $0x58] sm:$0xff]
      %v1756 = vld [vmem:[#allocation2 + $0x60] sm:$0xff]
      %v1757 = vld [vmem:[#allocation2 + $0x68] sm:$0xff]
      %v1758 = vld [vmem:[#allocation2 + $0x70] sm:$0xff]
      %v1759 = vld [vmem:[#allocation2 + $0x78] sm:$0xff]
      %1774 = vrot.lane.b32.xlu0 %v1746, 109
      %v1775 = vpop.permute.xlu0 %1774
      %1776 = vrot.lane.b32.xlu0 %v1747, 109
      %v1777 = vpop.permute.xlu0 %1776
      %1778 = vrot.lane.b32.xlu0 %v1748, 109
      %v1779 = vpop.permute.xlu0 %1778
      %1780 = vrot.lane.b32.xlu0 %v1749, 109
      %v1781 = vpop.permute.xlu0 %1780
      %1782 = vrot.lane.b32.xlu0 %v1750, 109
      %v1783 = vpop.permute.xlu0 %1782
      %1784 = vrot.lane.b32.xlu0 %v1751, 109
      %v1785 = vpop.permute.xlu0 %1784
      %1786 = vrot.lane.b32.xlu0 %v1752, 109
      %v1787 = vpop.permute.xlu0 %1786
      %1788 = vrot.lane.b32.xlu0 %v1753, 109
      %v1789 = vpop.permute.xlu0 %1788
      %1790 = vrot.lane.b32.xlu0 %v1754, 109
      %v1791 = vpop.permute.xlu0 %1790
      %1792 = vrot.lane.b32.xlu0 %v1755, 109
      %v1793 = vpop.permute.xlu0 %1792
      %1794 = vrot.lane.b32.xlu0 %v1756, 109
      %v1795 = vpop.permute.xlu0 %1794
      %1796 = vrot.lane.b32.xlu0 %v1757, 109
      %v1797 = vpop.permute.xlu0 %1796
      %1798 = vrot.lane.b32.xlu0 %v1758, 109
      %v1799 = vpop.permute.xlu0 %1798
      %1800 = vrot.lane.b32.xlu0 %v1759, 109
      %v1801 = vpop.permute.xlu0 %1800
      %v1802 = vsel %vm562, %v1775, %v1777
      %v1803 = vsel %vm562, %v1777, %v1779
      %v1804 = vsel %vm562, %v1779, %v1781
      %v1805 = vsel %vm562, %v1781, %v1783
      %v1806 = vsel %vm562, %v1783, %v1785
      %v1807 = vsel %vm562, %v1785, %v1787
      %v1808 = vsel %vm562, %v1789, %v1791
      %v1809 = vsel %vm562, %v1791, %v1793
      %v1810 = vsel %vm562, %v1793, %v1795
      %v1811 = vsel %vm562, %v1795, %v1797
      %v1812 = vsel %vm562, %v1797, %v1799
      %v1813 = vsel %vm562, %v1799, %v1801
      %1826 = vst [vmem:[#allocation3 + $0x300] sm:$0xff] %v1802
      %1827 = vst [vmem:[#allocation3 + $0x308] sm:$0xff] %v1803
      %1828 = vst [vmem:[#allocation3 + $0x310] sm:$0xff] %v1804
      %1829 = vst [vmem:[#allocation3 + $0x318] sm:$0xff] %v1805
      %1830 = vst [vmem:[#allocation3 + $0x320] sm:$0xff] %v1806
      %1831 = vst [vmem:[#allocation3 + $0x328] sm:$0xff] %v1807
      %1832 = vst [vmem:[#allocation3 + $0x330] sm:$0xff] %v1808
      %1833 = vst [vmem:[#allocation3 + $0x338] sm:$0xff] %v1809
      %1834 = vst [vmem:[#allocation3 + $0x340] sm:$0xff] %v1810
      %1835 = vst [vmem:[#allocation3 + $0x348] sm:$0xff] %v1811
      %1836 = vst [vmem:[#allocation3 + $0x350] sm:$0xff] %v1812
      %1837 = vst [vmem:[#allocation3 + $0x358] sm:$0xff] %v1813
      %1838 = vst [vmem:[#allocation3 + $0x360] sm:$0xff] %v84
      %1839 = vst [vmem:[#allocation3 + $0x368] sm:$0xff] %v85
      %1840 = vst [vmem:[#allocation3 + $0x370] sm:$0xff] %v86
      %1841 = vst [vmem:[#allocation3 + $0x378] sm:$0xff] %v87
      %1842 = vst [vmem:[#allocation3 + $0x380] sm:$0xff] %v88
      %1843 = vst [vmem:[#allocation3 + $0x388] sm:$0xff] %v89
      %v1844 = vld [vmem:[#allocation3] sm:$0xff]
      %v1845 = vld [vmem:[#allocation3 + $0x8] sm:$0xff]
      %v1846 = vld [vmem:[#allocation3 + $0x10] sm:$0xff]
      %v1847 = vld [vmem:[#allocation3 + $0x18] sm:$0xff]
      %v1848 = vld [vmem:[#allocation3 + $0x20] sm:$0xff]
      %v1849 = vld [vmem:[#allocation3 + $0x28] sm:$0xff]
      %v1850 = vld [vmem:[#allocation3 + $0x30] sm:$0xff]
      %v1851 = vld [vmem:[#allocation3 + $0x38] sm:$0xff]
      %v1852 = vld [vmem:[#allocation3 + $0x40] sm:$0xff]
      %v1853 = vld [vmem:[#allocation3 + $0x48] sm:$0xff]
      %v1854 = vld [vmem:[#allocation3 + $0x50] sm:$0xff]
      %v1855 = vld [vmem:[#allocation3 + $0x58] sm:$0xff]
      %v1856 = vld [vmem:[#allocation3 + $0x60] sm:$0xff]
      %v1857 = vld [vmem:[#allocation3 + $0x68] sm:$0xff]
      %v1858 = vld [vmem:[#allocation3 + $0x70] sm:$0xff]
      %v1859 = vld [vmem:[#allocation3 + $0x78] sm:$0xff]
      %v1860 = vld [vmem:[#allocation3 + $0x80] sm:$0xff]
      %v1861 = vld [vmem:[#allocation3 + $0x88] sm:$0xff]
      %v1862 = vld [vmem:[#allocation3 + $0x90] sm:$0xff]
      %v1863 = vld [vmem:[#allocation3 + $0x98] sm:$0xff]
      %v1864 = vld [vmem:[#allocation3 + $0xa0] sm:$0xff]
      %v1865 = vld [vmem:[#allocation3 + $0xa8] sm:$0xff]
      %v1866 = vld [vmem:[#allocation3 + $0xb0] sm:$0xff]
      %v1867 = vld [vmem:[#allocation3 + $0xb8] sm:$0xff]
      %v1868 = vld [vmem:[#allocation3 + $0xc0] sm:$0xff]
      %v1869 = vld [vmem:[#allocation3 + $0xc8] sm:$0xff]
      %v1870 = vld [vmem:[#allocation3 + $0xd0] sm:$0xff]
      %v1871 = vld [vmem:[#allocation3 + $0xd8] sm:$0xff]
      %v1872 = vld [vmem:[#allocation3 + $0xe0] sm:$0xff]
      %v1873 = vld [vmem:[#allocation3 + $0xe8] sm:$0xff]
      %v1874 = vld [vmem:[#allocation3 + $0xf0] sm:$0xff]
      %v1875 = vld [vmem:[#allocation3 + $0xf8] sm:$0xff]
      %v1876 = vld [vmem:[#allocation3 + $0x100] sm:$0xff]
      %v1877 = vld [vmem:[#allocation3 + $0x108] sm:$0xff]
      %v1878 = vld [vmem:[#allocation3 + $0x110] sm:$0xff]
      %v1879 = vld [vmem:[#allocation3 + $0x118] sm:$0xff]
      %v1880 = vld [vmem:[#allocation3 + $0x120] sm:$0xff]
      %v1881 = vld [vmem:[#allocation3 + $0x128] sm:$0xff]
      %v1882 = vld [vmem:[#allocation3 + $0x130] sm:$0xff]
      %v1883 = vld [vmem:[#allocation3 + $0x138] sm:$0xff]
      %v1884 = vld [vmem:[#allocation3 + $0x140] sm:$0xff]
      %v1885 = vld [vmem:[#allocation3 + $0x148] sm:$0xff]
      %v1886 = vld [vmem:[#allocation3 + $0x150] sm:$0xff]
      %v1887 = vld [vmem:[#allocation3 + $0x158] sm:$0xff]
      %v1888 = vld [vmem:[#allocation3 + $0x160] sm:$0xff]
      %v1889 = vld [vmem:[#allocation3 + $0x168] sm:$0xff]
      %v1890 = vld [vmem:[#allocation3 + $0x170] sm:$0xff]
      %v1891 = vld [vmem:[#allocation3 + $0x178] sm:$0xff]
      %v1892 = vld [vmem:[#allocation3 + $0x180] sm:$0xff]
      %v1893 = vld [vmem:[#allocation3 + $0x188] sm:$0xff]
      %v1894 = vld [vmem:[#allocation3 + $0x190] sm:$0xff]
      %v1895 = vld [vmem:[#allocation3 + $0x198] sm:$0xff]
      %v1896 = vld [vmem:[#allocation3 + $0x1a0] sm:$0xff]
      %v1897 = vld [vmem:[#allocation3 + $0x1a8] sm:$0xff]
      %v1898 = vld [vmem:[#allocation3 + $0x1b0] sm:$0xff]
      %v1899 = vld [vmem:[#allocation3 + $0x1b8] sm:$0xff]
      %v1900 = vld [vmem:[#allocation3 + $0x1c0] sm:$0xff]
      %v1901 = vld [vmem:[#allocation3 + $0x1c8] sm:$0xff]
      %v1902 = vld [vmem:[#allocation3 + $0x1d0] sm:$0xff]
      %v1903 = vld [vmem:[#allocation3 + $0x1d8] sm:$0xff]
      %v1904 = vld [vmem:[#allocation3 + $0x1e0] sm:$0xff]
      %v1905 = vld [vmem:[#allocation3 + $0x1e8] sm:$0xff]
      %v1906 = vld [vmem:[#allocation3 + $0x1f0] sm:$0xff]
      %v1907 = vld [vmem:[#allocation3 + $0x1f8] sm:$0xff]
      %v1908 = vld [vmem:[#allocation3 + $0x200] sm:$0xff]
      %v1909 = vld [vmem:[#allocation3 + $0x208] sm:$0xff]
      %v1910 = vld [vmem:[#allocation3 + $0x210] sm:$0xff]
      %v1911 = vld [vmem:[#allocation3 + $0x218] sm:$0xff]
      %v1912 = vld [vmem:[#allocation3 + $0x220] sm:$0xff]
      %v1913 = vld [vmem:[#allocation3 + $0x228] sm:$0xff]
      %v1914 = vld [vmem:[#allocation3 + $0x230] sm:$0xff]
      %v1915 = vld [vmem:[#allocation3 + $0x238] sm:$0xff]
      %v1916 = vld [vmem:[#allocation3 + $0x240] sm:$0xff]
      %v1917 = vld [vmem:[#allocation3 + $0x248] sm:$0xff]
      %v1918 = vld [vmem:[#allocation3 + $0x250] sm:$0xff]
      %v1919 = vld [vmem:[#allocation3 + $0x258] sm:$0xff]
      %v1920 = vld [vmem:[#allocation3 + $0x260] sm:$0xff]
      %v1921 = vld [vmem:[#allocation3 + $0x268] sm:$0xff]
      %v1922 = vld [vmem:[#allocation3 + $0x270] sm:$0xff]
      %v1923 = vld [vmem:[#allocation3 + $0x278] sm:$0xff]
      %v1924 = vld [vmem:[#allocation3 + $0x280] sm:$0xff]
      %v1925 = vld [vmem:[#allocation3 + $0x288] sm:$0xff]
      %v1926 = vld [vmem:[#allocation3 + $0x290] sm:$0xff]
      %v1927 = vld [vmem:[#allocation3 + $0x298] sm:$0xff]
      %v1928 = vld [vmem:[#allocation3 + $0x2a0] sm:$0xff]
      %v1929 = vld [vmem:[#allocation3 + $0x2a8] sm:$0xff]
      %v1930 = vld [vmem:[#allocation3 + $0x2b0] sm:$0xff]
      %v1931 = vld [vmem:[#allocation3 + $0x2b8] sm:$0xff]
      %v1932 = vld [vmem:[#allocation3 + $0x2c0] sm:$0xff]
      %v1933 = vld [vmem:[#allocation3 + $0x2c8] sm:$0xff]
      %v1934 = vld [vmem:[#allocation3 + $0x2d0] sm:$0xff]
      %v1935 = vld [vmem:[#allocation3 + $0x2d8] sm:$0xff]
      %v1936 = vld [vmem:[#allocation3 + $0x2e0] sm:$0xff]
      %v1937 = vld [vmem:[#allocation3 + $0x2e8] sm:$0xff]
      %v1938 = vld [vmem:[#allocation3 + $0x2f0] sm:$0xff]
      %v1939 = vld [vmem:[#allocation3 + $0x2f8] sm:$0xff]
      %v1940 = vld [vmem:[#allocation3 + $0x300] sm:$0xff]
      %v1941 = vld [vmem:[#allocation3 + $0x308] sm:$0xff]
      %v1942 = vld [vmem:[#allocation3 + $0x310] sm:$0xff]
      %v1943 = vld [vmem:[#allocation3 + $0x318] sm:$0xff]
      %v1944 = vld [vmem:[#allocation3 + $0x320] sm:$0xff]
      %v1945 = vld [vmem:[#allocation3 + $0x328] sm:$0xff]
      %v1946 = vld [vmem:[#allocation3 + $0x330] sm:$0xff]
      %v1947 = vld [vmem:[#allocation3 + $0x338] sm:$0xff]
      %v1948 = vld [vmem:[#allocation3 + $0x340] sm:$0xff]
      %v1949 = vld [vmem:[#allocation3 + $0x348] sm:$0xff]
      %v1950 = vld [vmem:[#allocation3 + $0x350] sm:$0xff]
      %v1951 = vld [vmem:[#allocation3 + $0x358] sm:$0xff]
      %v1952 = vld [vmem:[#allocation3 + $0x360] sm:$0xff]
      %v1953 = vld [vmem:[#allocation3 + $0x368] sm:$0xff]
      %v1954 = vld [vmem:[#allocation3 + $0x370] sm:$0xff]
      %v1955 = vld [vmem:[#allocation3 + $0x378] sm:$0xff]
      %v1956 = vld [vmem:[#allocation3 + $0x380] sm:$0xff]
      %v1957 = vld [vmem:[#allocation3 + $0x388] sm:$0xff]
      %1959 = vset.pattern.permute.xlu0 0
      %1960 = vperm.xlu0 %1959, %v1065
      %v1961 = vpop.permute.xlu0 %1960
      %vm1963 = vcmask 195584
      %v1965 = vsel %vm1963, %v1063, 0
      %1967 = vmatprep.subr.mxu0 %v1845
      %1968 = vmatpush1.msra.mxu0 %v1844
      %1969 = vmatprep.subr.mxu0 %v1851
      %1970 = vmatpush1.msra.mxu0 %v1850
      %1971 = vmatprep.subr.mxu0 %v1857
      %1972 = vmatpush1.msra.mxu0 %v1856
      %1973 = vmatprep.subr.mxu0 %v1863
      %1974 = vmatpush1.msra.mxu0 %v1862
      %1975 = vmatprep.subr.mxu0 %v1869
      %1976 = vmatpush1.msra.mxu0 %v1868
      %1977 = vmatprep.subr.mxu0 %v1875
      %1978 = vmatpush1.msra.mxu0 %v1874
      %1979 = vmatprep.subr.mxu0 %v1881
      %1980 = vmatpush1.msra.mxu0 %v1880
      %1981 = vmatprep.subr.mxu0 %v1887
      %1982 = vmatpush1.msra.mxu0 %v1886
      %1983 = vmatprep.subr.mxu0 %v1893
      %1984 = vmatpush1.msra.mxu0 %v1892
      %1985 = vmatprep.subr.mxu0 %v1899
      %1986 = vmatpush1.msra.mxu0 %v1898
      %1987 = vmatprep.subr.mxu0 %v1905
      %1988 = vmatpush1.msra.mxu0 %v1904
      %1989 = vmatprep.subr.mxu0 %v1911
      %1990 = vmatpush1.msra.mxu0 %v1910
      %1991 = vmatprep.subr.mxu0 %v1917
      %1992 = vmatpush1.msra.mxu0 %v1916
      %1993 = vmatprep.subr.mxu0 %v1923
      %1994 = vmatpush1.msra.mxu0 %v1922
      %1995 = vmatprep.subr.mxu0 %v1929
      %1996 = vmatpush1.msra.mxu0 %v1928
      %1997 = vmatprep.subr.mxu0 %v1935
      %1998 = vmatpush1.msra.mxu0 %v1934
      %1999 = vmatprep.subr.mxu0 %v1941
      %2000 = vmatpush1.msra.mxu0 %v1940
      %2001 = vmatprep.subr.mxu0 %v1947
      %2002 = vmatpush1.msra.mxu0 %v1946
      %2003 = vmatprep.subr.mxu0 %v1953
      %2004 = vmatpush1.msra.mxu0 %v1952
      %2005 = vmatprep.subr.mxu0 0.0
      %2006 = vmatpush1.msra.mxu0 0.0
      %2007 = vmatprep.subr.mxu0 0.0
      %2008 = vmatpush1.msra.mxu0 0.0
      %2009 = vmatprep.subr.mxu0 0.0
      %2010 = vmatpush1.msra.mxu0 0.0
      %2011 = vmatprep.subr.mxu0 0.0
      %2012 = vmatpush1.msra.mxu0 0.0
      %2013 = vmatprep.subr.mxu0 0.0
      %2014 = vmatpush1.msra.mxu0 0.0
      %2015 = vmatprep.subr.mxu0 0.0
      %2016 = vmatpush1.msra.mxu0 0.0
      %2017 = vmatprep.subr.mxu0 0.0
      %2018 = vmatpush1.msra.mxu0 0.0
      %2019 = vmatprep.subr.mxu0 0.0
      %2020 = vmatpush1.msra.mxu0 0.0
      %2021 = vmatprep.subr.mxu0 0.0
      %2022 = vmatpush1.msra.mxu0 0.0
      %2023 = vmatprep.subr.mxu0 0.0
      %2024 = vmatpush1.msra.mxu0 0.0
      %2025 = vmatprep.subr.mxu0 0.0
      %2026 = vmatpush1.msra.mxu0 0.0
      %2027 = vmatprep.subr.mxu0 0.0
      %2028 = vmatpush1.msra.mxu0 0.0
      %2029 = vmatprep.subr.mxu0 0.0
      %2030 = vmatpush1.msra.mxu0 0.0
      %2031 = vmatprep.mubr.f32.mxu0 %v1965
      %2032 = vmatmul.mubr.f32.gmra.mrb[0].mxu0 %v1062
      %v2033 = vpop.f32.mrb[0].mxu0
      %v2034 = vadd.f32 %v1961, %v2033
      %v2035 = vpop.f32.mrb[0].mxu0
      %v2036 = vadd.f32 %v1961, %v2035
      %2037 = vdwg.mxu0
      %2038 = vmatprep.subr.mxu0 %v1847
      %2039 = vmatpush1.msra.mxu0 %v1846
      %2040 = vmatprep.subr.mxu0 %v1853
      %2041 = vmatpush1.msra.mxu0 %v1852
      %2042 = vmatprep.subr.mxu0 %v1859
      %2043 = vmatpush1.msra.mxu0 %v1858
      %2044 = vmatprep.subr.mxu0 %v1865
      %2045 = vmatpush1.msra.mxu0 %v1864
      %2046 = vmatprep.subr.mxu0 %v1871
      %2047 = vmatpush1.msra.mxu0 %v1870
      %2048 = vmatprep.subr.mxu0 %v1877
      %2049 = vmatpush1.msra.mxu0 %v1876
      %2050 = vmatprep.subr.mxu0 %v1883
      %2051 = vmatpush1.msra.mxu0 %v1882
      %2052 = vmatprep.subr.mxu0 %v1889
      %2053 = vmatpush1.msra.mxu0 %v1888
      %2054 = vmatprep.subr.mxu0 %v1895
      %2055 = vmatpush1.msra.mxu0 %v1894
      %2056 = vmatprep.subr.mxu0 %v1901
      %2057 = vmatpush1.msra.mxu0 %v1900
      %2058 = vmatprep.subr.mxu0 %v1907
      %2059 = vmatpush1.msra.mxu0 %v1906
      %2060 = vmatprep.subr.mxu0 %v1913
      %2061 = vmatpush1.msra.mxu0 %v1912
      %2062 = vmatprep.subr.mxu0 %v1919
      %2063 = vmatpush1.msra.mxu0 %v1918
      %2064 = vmatprep.subr.mxu0 %v1925
      %2065 = vmatpush1.msra.mxu0 %v1924
      %2066 = vmatprep.subr.mxu0 %v1931
      %2067 = vmatpush1.msra.mxu0 %v1930
      %2068 = vmatprep.subr.mxu0 %v1937
      %2069 = vmatpush1.msra.mxu0 %v1936
      %2070 = vmatprep.subr.mxu0 %v1943
      %2071 = vmatpush1.msra.mxu0 %v1942
      %2072 = vmatprep.subr.mxu0 %v1949
      %2073 = vmatpush1.msra.mxu0 %v1948
      %2074 = vmatprep.subr.mxu0 %v1955
      %2075 = vmatpush1.msra.mxu0 %v1954
      %2076 = vmatprep.subr.mxu0 0.0
      %2077 = vmatpush1.msra.mxu0 0.0
      %2078 = vmatprep.subr.mxu0 0.0
      %2079 = vmatpush1.msra.mxu0 0.0
      %2080 = vmatprep.subr.mxu0 0.0
      %2081 = vmatpush1.msra.mxu0 0.0
      %2082 = vmatprep.subr.mxu0 0.0
      %2083 = vmatpush1.msra.mxu0 0.0
      %2084 = vmatprep.subr.mxu0 0.0
      %2085 = vmatpush1.msra.mxu0 0.0
      %2086 = vmatprep.subr.mxu0 0.0
      %2087 = vmatpush1.msra.mxu0 0.0
      %2088 = vmatprep.subr.mxu0 0.0
      %2089 = vmatpush1.msra.mxu0 0.0
      %2090 = vmatprep.subr.mxu0 0.0
      %2091 = vmatpush1.msra.mxu0 0.0
      %2092 = vmatprep.subr.mxu0 0.0
      %2093 = vmatpush1.msra.mxu0 0.0
      %2094 = vmatprep.subr.mxu0 0.0
      %2095 = vmatpush1.msra.mxu0 0.0
      %2096 = vmatprep.subr.mxu0 0.0
      %2097 = vmatpush1.msra.mxu0 0.0
      %2098 = vmatprep.subr.mxu0 0.0
      %2099 = vmatpush1.msra.mxu0 0.0
      %2100 = vmatprep.subr.mxu0 0.0
      %2101 = vmatpush1.msra.mxu0 0.0
      %2102 = vmatprep.mubr.f32.mxu0 %v1965
      %2103 = vmatmul.mubr.f32.gmra.mrb[0].mxu0 %v1062
      %v2104 = vpop.f32.mrb[0].mxu0
      %v2105 = vadd.f32 %v1961, %v2104
      %v2106 = vpop.f32.mrb[0].mxu0
      %v2107 = vadd.f32 %v1961, %v2106
      %2108 = vdwg.mxu0
      %2109 = vmatprep.subr.mxu0 %v1849
      %2110 = vmatpush1.msra.mxu0 %v1848
      %2111 = vmatprep.subr.mxu0 %v1855
      %2112 = vmatpush1.msra.mxu0 %v1854
      %2113 = vmatprep.subr.mxu0 %v1861
      %2114 = vmatpush1.msra.mxu0 %v1860
      %2115 = vmatprep.subr.mxu0 %v1867
      %2116 = vmatpush1.msra.mxu0 %v1866
      %2117 = vmatprep.subr.mxu0 %v1873
      %2118 = vmatpush1.msra.mxu0 %v1872
      %2119 = vmatprep.subr.mxu0 %v1879
      %2120 = vmatpush1.msra.mxu0 %v1878
      %2121 = vmatprep.subr.mxu0 %v1885
      %2122 = vmatpush1.msra.mxu0 %v1884
      %2123 = vmatprep.subr.mxu0 %v1891
      %2124 = vmatpush1.msra.mxu0 %v1890
      %2125 = vmatprep.subr.mxu0 %v1897
      %2126 = vmatpush1.msra.mxu0 %v1896
      %2127 = vmatprep.subr.mxu0 %v1903
      %2128 = vmatpush1.msra.mxu0 %v1902
      %2129 = vmatprep.subr.mxu0 %v1909
      %2130 = vmatpush1.msra.mxu0 %v1908
      %2131 = vmatprep.subr.mxu0 %v1915
      %2132 = vmatpush1.msra.mxu0 %v1914
      %2133 = vmatprep.subr.mxu0 %v1921
      %2134 = vmatpush1.msra.mxu0 %v1920
      %2135 = vmatprep.subr.mxu0 %v1927
      %2136 = vmatpush1.msra.mxu0 %v1926
      %2137 = vmatprep.subr.mxu0 %v1933
      %2138 = vmatpush1.msra.mxu0 %v1932
      %2139 = vmatprep.subr.mxu0 %v1939
      %2140 = vmatpush1.msra.mxu0 %v1938
      %2141 = vmatprep.subr.mxu0 %v1945
      %2142 = vmatpush1.msra.mxu0 %v1944
      %2143 = vmatprep.subr.mxu0 %v1951
      %2144 = vmatpush1.msra.mxu0 %v1950
      %2145 = vmatprep.subr.mxu0 %v1957
      %2146 = vmatpush1.msra.mxu0 %v1956
      %2147 = vmatprep.subr.mxu0 0.0
      %2148 = vmatpush1.msra.mxu0 0.0
      %2149 = vmatprep.subr.mxu0 0.0
      %2150 = vmatpush1.msra.mxu0 0.0
      %2151 = vmatprep.subr.mxu0 0.0
      %2152 = vmatpush1.msra.mxu0 0.0
      %2153 = vmatprep.subr.mxu0 0.0
      %2154 = vmatpush1.msra.mxu0 0.0
      %2155 = vmatprep.subr.mxu0 0.0
      %2156 = vmatpush1.msra.mxu0 0.0
      %2157 = vmatprep.subr.mxu0 0.0
      %2158 = vmatpush1.msra.mxu0 0.0
      %2159 = vmatprep.subr.mxu0 0.0
      %2160 = vmatpush1.msra.mxu0 0.0
      %2161 = vmatprep.subr.mxu0 0.0
      %2162 = vmatpush1.msra.mxu0 0.0
      %2163 = vmatprep.subr.mxu0 0.0
      %2164 = vmatpush1.msra.mxu0 0.0
      %2165 = vmatprep.subr.mxu0 0.0
      %2166 = vmatpush1.msra.mxu0 0.0
      %2167 = vmatprep.subr.mxu0 0.0
      %2168 = vmatpush1.msra.mxu0 0.0
      %2169 = vmatprep.subr.mxu0 0.0
      %2170 = vmatpush1.msra.mxu0 0.0
      %2171 = vmatprep.subr.mxu0 0.0
      %2172 = vmatpush1.msra.mxu0 0.0
      %2173 = vmatprep.mubr.f32.mxu0 %v1965
      %2174 = vmatmul.mubr.f32.gmra.mrb[0].mxu0 %v1062
      %v2175 = vpop.f32.mrb[0].mxu0
      %v2176 = vadd.f32 %v1961, %v2175
      %v2177 = vpop.f32.mrb[0].mxu0
      %v2178 = vadd.f32 %v1961, %v2177
      %2179 = vdwg.mxu0
    $region46: #{tpu_custom_call.1} parent=1 // loop_footer
      %s83 = sadd.s32 1, %s79
    $region47: #{tpu_custom_call.1} parent=1 // loop_footer_branch
      %78 = sbr.rel target = $region43
    $region48: #{tpu_custom_call.1} parent=1 // loop_exit
      _
    %2180 = vst [vmem:[#allocation4] sm:$0xff] %v84
    %2181 = vst [vmem:[#allocation4 + $0x8] sm:$0xff] %v85
    %2182 = vst [vmem:[#allocation4 + $0x10] sm:$0xff] %v86
    %2183 = vst [vmem:[#allocation4 + $0x18] sm:$0xff] %v87
    %2184 = vst [vmem:[#allocation4 + $0x20] sm:$0xff] %v88
    %2185 = vst [vmem:[#allocation4 + $0x28] sm:$0xff] %v89
    // Predicated region
    $region49: #{tpu_custom_call.1} parent=1 // pred_check
      _
    $region50: #{tpu_custom_call.1} parent=1 // pred_check_branch
      %2187 = sbr.rel (0) target = $region52
    $region51: #{tpu_custom_call.1} parent=1 // pred_region
      %s2189 = ssub.s32 768, 768
      %2190 = vsyncadd [#allocation5], %s2189
      %s2192 = sshll.u32 [#allocation4], 4
      %s2193 = int_to_ptr.vmem [resolvable:$true] %s2192
      %2195 = dma.vmem_to_hbm [thread:$0]  %s2193, 768, %s10, [#allocation5]
    $region52: #{tpu_custom_call.1} parent=1 // pred_fallthru
      _
    // Predicated region
    $region53: #{tpu_custom_call.1} parent=1 // pred_check
      _
    $region54: #{tpu_custom_call.1} parent=1 // pred_check_branch
      %2197 = sbr.rel (0) target = $region56
    $region55: #{tpu_custom_call.1} parent=1 // pred_region
      %2198 = dma.done [#allocation5], 768
    $region56: #{tpu_custom_call.1} parent=1 // pred_fallthru
      _
    %2199 = vsyncpa [#allocation5], 1

</llo_original>
